<compile_context>
chip_gen: v5e
topology: v5e:2x2
jax: 0.10.0
libtpu: 0.0.40
codegen_flags: <defaults>
</compile_context>

<pallas_src>
import functools

import jax
import jax.numpy as jnp
from jax.experimental import pallas as pl
from jax.experimental.pallas import tpu as pltpu


def _vmem_budget_bytes():
    """~75% of physical VMEM (v5e/v6e ~96 MiB, v7x ~48 MiB); safe fallback."""
    try:
        info = pltpu.get_tpu_info()
        cap = getattr(info, "vmem_capacity_bytes", None)
        if cap:
            return int(min(int(cap) * 3 // 4, 112 * 1024 * 1024))
    except Exception:
        pass
    return 48 * 1024 * 1024     # fits under v7x's 64 MiB with headroom


def _context_kernel(x_ref, wkv_ref, wout_ref, mask_ref, mall_ref,
                    s_ref, r_ref, m_ref,
                    *, hidden, n_valid, n_pad, tile_n, num_tiles):
    """Grid = (batch, n_tile).  Online k-softmax context, wout folded in.

    x_ref    : (1, dim, tile_n)   bf16 input features
    wkv_ref  : (2*hidden, dim)    bf16 k,v rows of to_qkv weight
    wout_ref : (dim, hidden)      bf16 to_out weight * dim_head**-0.5
    mask_ref : (hidden, hidden)   f32 per-head block-diagonal mask
    mall_ref : (1, dim, hidden)   bf16 output (written on the last tile only)
    scratch  : s_ref (hidden,hidden), r_ref/m_ref (hidden,1)   f32
    """
    t = pl.program_id(1)

    @pl.when(t == 0)
    def _init():
        s_ref[...] = jnp.zeros_like(s_ref)
        r_ref[...] = jnp.zeros_like(r_ref)
        m_ref[...] = jnp.full_like(m_ref, -jnp.inf)

    x_t = x_ref[0]                                             # (dim, tile) bf16
    kv = jax.lax.dot_general(                                  # W_kv @ x
        wkv_ref[...], x_t, (((1,), (0,)), ((), ())),
        preferred_element_type=jnp.float32)                    # (2*hidden, tile)
    k = kv[:hidden, :]
    v = kv[hidden:, :]

    m_old = m_ref[...]                                         # (hidden, 1)
    m_new = jnp.maximum(m_old, jnp.max(k, axis=1, keepdims=True))
    alpha = jnp.exp(m_old - m_new)                             # 0 on first tile
    ek = jnp.exp(k - m_new)                                    # (hidden, tile)
    if n_valid != n_pad:                                       # static branch
        col = (jax.lax.broadcasted_iota(jnp.int32, (1, tile_n), 1)
               + t * tile_n)
        ek = jnp.where(col < n_valid, ek, 0.0)                 # mask padding

    s_ref[...] = s_ref[...] * alpha + jax.lax.dot_general(
        ek.astype(jnp.bfloat16), v.astype(jnp.bfloat16),
        (((1,), (1,)), ((), ())),
        preferred_element_type=jnp.float32)                    # (hidden, hidden)
    r_ref[...] = r_ref[...] * alpha + jnp.sum(ek, axis=1, keepdims=True)
    m_ref[...] = m_new

    @pl.when(t == num_tiles - 1)
    def _finalize():
        inv_r = pl.reciprocal(r_ref[...], approx=True)         # (hidden, 1)
        c_blk = (s_ref[...] * inv_r) * mask_ref[...]           # per-head contexts
        # M_all[c, h*dh + d] = sum_e wout[c, h*dh + e] * context_h[d, e]
        mall = jax.lax.dot_general(
            wout_ref[...], c_blk.astype(jnp.bfloat16),
            (((1,), (1,)), ((), ())),
            preferred_element_type=jnp.float32)                # (dim, hidden)
        mall_ref[0] = mall.astype(jnp.bfloat16)


def _output_kernel(x_ref, wq_ref, mall_ref, bout_ref, g_ref, o_ref,
                   *, heads, dim_head, hidden, tile_n):
    """Grid = (batch, n_tile), both axes parallel.

    x_ref    : (1, dim, tile_n)  bf16
    wq_ref   : (hidden, dim)     bf16 q rows of to_qkv weight
    mall_ref : (1, dim, hidden)  bf16 fused wout*context from the context pass
    bout_ref : (dim, 1)          f32 to_out bias
    g_ref    : (dim, 1)          f32 RMSNorm gain * sqrt(dim)
    o_ref    : (1, dim, tile_n)  f32 output
    """
    x_t = x_ref[0]                                             # (dim, tile) bf16
    q = jax.lax.dot_general(                                   # W_q @ x
        wq_ref[...], x_t, (((1,), (0,)), ((), ())),
        preferred_element_type=jnp.float32)                    # (hidden, tile)

    # hoisted q-softmax over the head dim (axis 1 of (heads, dim_head, tile))
    q3 = q.reshape(heads, dim_head, tile_n)
    q3 = jnp.exp(q3 - jnp.max(q3, axis=1, keepdims=True))
    q3 = q3 * pl.reciprocal(jnp.sum(q3, axis=1, keepdims=True), approx=True)
    q_sm = q3.reshape(hidden, tile_n).astype(jnp.bfloat16)

    # fused output projection: one (dim, hidden) @ (hidden, tile) matmul
    y = jax.lax.dot_general(
        mall_ref[0], q_sm, (((1,), (0,)), ((), ())),
        preferred_element_type=jnp.float32)                    # (dim, tile)
    y = y + bout_ref[...]                                      # conv bias

    # RMSNorm: F.normalize over channels * g * sqrt(dim) (g pre-scaled)
    ss = jnp.sum(y * y, axis=0, keepdims=True)                 # (1, tile)
    y = y * jax.lax.rsqrt(jnp.maximum(ss, 1e-24))              # == /max(|y|,1e-12)
    o_ref[0] = y * g_ref[...]


def linear_attention(x, wqkv, wout, bout, g, *, heads=4, dim_head=32,
                     max_tile_n=None):
    b, c, h, w = x.shape
    dim = c
    hidden = heads * dim_head
    n = h * w
    scale = dim_head ** -0.5

    # ---- lane-dense spatial tiling from a per-generation VMEM budget -------
    vmem_limit = _vmem_budget_bytes()
    bytes_per_col = 16 * dim            # 3x-buffered bf16 in + 2x-buffered f32 out
    block_budget = int(vmem_limit * 0.6)
    cap = max(512, min(4096, (block_budget // bytes_per_col) // 512 * 512))
    if max_tile_n is not None:
        cap = min(cap, max_tile_n)
    n_128 = ((n + 127) // 128) * 128
    if n_128 <= cap:
        tile_n, num_tiles = n_128, 1
    else:
        tile_n = cap
        num_tiles = -(-n // tile_n)
    n_pad = num_tiles * tile_n

    # ---- HBM-side prep: bf16 x (read twice, only ever an MXU operand) ------
    x_flat = x.reshape(b, dim, n).astype(jnp.bfloat16)
    if n_pad != n:
        x_flat = jnp.pad(x_flat, ((0, 0), (0, 0), (0, n_pad - n)))

    # weights in (out_ch, in_ch) layout -> plain (M,K)x(K,N) contractions
    wqkv_bf = wqkv.astype(jnp.bfloat16)                        # (3*hidden, dim)
    wq = wqkv_bf[:hidden, :]                                   # (hidden, dim)
    wkv = wqkv_bf[hidden:, :]                                  # (2*hidden, dim)
    wout_s = (wout.astype(jnp.float32) * scale).astype(jnp.bfloat16)  # (dim, hidden)
    bout_c = bout.reshape(dim, 1).astype(jnp.float32)
    g_s = g.reshape(dim, 1).astype(jnp.float32) * (dim ** 0.5)
    hid = jnp.arange(hidden) // dim_head
    mask = (hid[:, None] == hid[None, :]).astype(jnp.float32)  # (hidden, hidden)

    def x_spec(index_map):
        if num_tiles >= 3:
            return pl.BlockSpec((1, dim, tile_n), index_map,
                                pipeline_mode=pl.Buffered(3))
        return pl.BlockSpec((1, dim, tile_n), index_map)

    # ---- pass 1: per-batch context + folded wout (tiny bf16 output only) ---
    mall = pl.pallas_call(
        functools.partial(_context_kernel, hidden=hidden, n_valid=n,
                          n_pad=n_pad, tile_n=tile_n, num_tiles=num_tiles),
        out_shape=jax.ShapeDtypeStruct((b, dim, hidden), jnp.bfloat16),
        grid_spec=pltpu.PrefetchScalarGridSpec(
            num_scalar_prefetch=0,
            grid=(b, num_tiles),
            in_specs=[
                x_spec(lambda bi, t: (bi, 0, t)),
                pl.BlockSpec((2 * hidden, dim), lambda bi, t: (0, 0)),
                pl.BlockSpec((dim, hidden), lambda bi, t: (0, 0)),
                pl.BlockSpec((hidden, hidden), lambda bi, t: (0, 0)),
            ],
            out_specs=pl.BlockSpec((1, dim, hidden), lambda bi, t: (bi, 0, 0)),
            scratch_shapes=[
                pltpu.VMEM((hidden, hidden), jnp.float32),   # S accumulator
                pltpu.VMEM((hidden, 1), jnp.float32),        # row sums r
                pltpu.VMEM((hidden, 1), jnp.float32),        # running max m
            ],
        ),
        compiler_params=pltpu.CompilerParams(
            dimension_semantics=("parallel", "arbitrary"),
            vmem_limit_bytes=vmem_limit),
    )(x_flat, wkv, wout_s, mask)

    # ---- pass 2: q-softmax + fused output matmul + bias + RMSNorm ----------
    out = pl.pallas_call(
        functools.partial(_output_kernel, heads=heads, dim_head=dim_head,
                          hidden=hidden, tile_n=tile_n),
        out_shape=jax.ShapeDtypeStruct((b, dim, n_pad), jnp.float32),
        grid_spec=pltpu.PrefetchScalarGridSpec(
            num_scalar_prefetch=0,
            grid=(b, num_tiles),
            in_specs=[
                x_spec(lambda bi, t: (bi, 0, t)),
                pl.BlockSpec((hidden, dim), lambda bi, t: (0, 0)),
                pl.BlockSpec((1, dim, hidden), lambda bi, t: (bi, 0, 0)),
                pl.BlockSpec((dim, 1), lambda bi, t: (0, 0)),
                pl.BlockSpec((dim, 1), lambda bi, t: (0, 0)),
            ],
            out_specs=pl.BlockSpec((1, dim, tile_n), lambda bi, t: (bi, 0, t)),
        ),
        compiler_params=pltpu.CompilerParams(
            dimension_semantics=("parallel", "parallel"),
            vmem_limit_bytes=vmem_limit),
    )(x_flat, wq, mall, bout_c, g_s)

    return out[:, :, :n].reshape(b, dim, h, w)


def reference(x, wqkv, wout, bout, g, heads, dim_head):
    """Pure-JAX f32 re-implementation of the PyTorch forward (verification)."""
    b, c, h, w = x.shape
    n = h * w
    scale = dim_head ** -0.5
    xf = x.reshape(b, c, n)
    qkv = jnp.einsum('oc,bcn->bon', wqkv, xf)
    qkv = qkv.reshape(b, 3, heads, dim_head, n)
    q, k, v = qkv[:, 0], qkv[:, 1], qkv[:, 2]
    q = jax.nn.softmax(q, axis=-2) * scale
    k = jax.nn.softmax(k, axis=-1)
    context = jnp.einsum('bhdn,bhen->bhde', k, v)
    out = jnp.einsum('bhde,bhdn->bhen', context, q)
    out = out.reshape(b, heads * dim_head, n)
    y = jnp.einsum('oc,bcn->bon', wout, out) + bout.reshape(1, c, 1)
    norm = jnp.sqrt(jnp.sum(y * y, axis=1, keepdims=True))
    y = y / jnp.maximum(norm, 1e-12)
    y = y * g.reshape(1, c, 1) * (c ** 0.5)
    return y.reshape(b, c, h, w)


if __name__ == "__main__":
    def run_case(key, b, dim, h, w, heads=4, dim_head=32, tol=5e-2,
                 max_tile_n=None):
        hidden = heads * dim_head
        k1, k2, k3, k4 = jax.random.split(key, 4)
        x = jax.random.normal(k1, (b, dim, h, w), jnp.float32)
        wqkv = jax.random.normal(k2, (3 * hidden, dim), jnp.float32) * 0.1
        wout = jax.random.normal(k3, (dim, hidden), jnp.float32) * 0.1
        bout = jax.random.normal(k4, (dim, 1), jnp.float32) * 0.1
        g = jnp.ones((dim, 1), jnp.float32)

        out = linear_attention(x, wqkv, wout, bout, g,
                               heads=heads, dim_head=dim_head,
                               max_tile_n=max_tile_n)
        out = jax.block_until_ready(out)
        ref = reference(x, wqkv, wout, bout, g, heads, dim_head)
        assert out.shape == (b, dim, h, w)
        if not jnp.allclose(out, ref, atol=tol, rtol=tol):
            err = float(jnp.max(jnp.abs(out - ref)))
            raise AssertionError(f"Pallas kernel mismatch vs reference "
                                 f"(max abs err {err:.4e})")

    key = jax.random.PRNGKey(0)
    ka, kb = jax.random.split(key)
    # N = 256: single lane-dense tile, no padding.
    run_case(ka, b=2, dim=8, h=16, w=16)
    # N = 1296, forced 3 tiles of 512: exercises the online k-softmax
    # accumulators, padded/masked last tile and Buffered(3) input pipelining.
    run_case(kb, b=1, dim=16, h=36, w=36, max_tile_n=512)
    # N = 1296, auto tile selection: single padded 1408-wide tile.
    run_case(kb, b=1, dim=16, h=36, w=36)
    print("KERNEL_OK")
</pallas_src>

<mosaic_0001>
module attributes {stable_mosaic.version = 11 : i64} {
  func.func @_context_kernel(%arg0: i32, %arg1: i32, %arg2: memref<1x8x256xbf16, #tpu.memory_space<vmem>>, %arg3: memref<256x8xbf16, #tpu.memory_space<vmem>>, %arg4: memref<8x128xbf16, #tpu.memory_space<vmem>>, %arg5: memref<128x128xf32, #tpu.memory_space<vmem>>, %arg6: memref<1x8x128xbf16, #tpu.memory_space<vmem>>, %arg7: memref<128x128xf32, #tpu.memory_space<vmem>>, %arg8: memref<128x1xf32, #tpu.memory_space<vmem>>, %arg9: memref<128x1xf32, #tpu.memory_space<vmem>>) attributes {dimension_semantics = [#tpu.dimension_semantics<parallel>, #tpu.dimension_semantics<arbitrary>], iteration_bounds = array<i64: 2, 1>, scalar_prefetch = 0 : i64, scratch_operands = 3 : i64, tpu.core_type = #tpu.core_type<tc>, window_params = [{transform_indices = @transform_0, window_bounds = array<i64: 1, 8, 256>}, {pipeline_mode = #tpu.pipeline_mode<synchronous>, transform_indices = @transform_1, window_bounds = array<i64: 256, 8>}, {pipeline_mode = #tpu.pipeline_mode<synchronous>, transform_indices = @transform_2, window_bounds = array<i64: 8, 128>}, {pipeline_mode = #tpu.pipeline_mode<synchronous>, transform_indices = @transform_3, window_bounds = array<i64: 128, 128>}, {transform_indices = @transform_4, window_bounds = array<i64: 1, 8, 128>}]} {
    %c0_i32 = arith.constant 0 : i32
    %0 = arith.cmpi eq, %arg1, %c0_i32 : i32
    %1 = arith.extui %0 : i1 to i32
    %c0_i32_0 = arith.constant 0 : i32
    %2 = arith.cmpi ne, %1, %c0_i32_0 : i32
    scf.if %2 {
      %cst_22 = arith.constant 0.000000e+00 : f32
      %36 = vector.broadcast %cst_22 : f32 to vector<128x128xf32>
      %c0_23 = arith.constant 0 : index
      %c0_24 = arith.constant 0 : index
      %37 = vector.load %arg7[%c0_23, %c0_24] : memref<128x128xf32, #tpu.memory_space<vmem>>, vector<128x128xf32>
      tpu.vector_store %arg7[%c0_23, %c0_24], %36 {strides = array<i32>} : memref<128x128xf32, #tpu.memory_space<vmem>>, vector<128x128xf32>,
      %cst_25 = arith.constant 0.000000e+00 : f32
      %38 = vector.broadcast %cst_25 : f32 to vector<128x1xf32>
      %c0_26 = arith.constant 0 : index
      %c0_27 = arith.constant 0 : index
      %39 = vector.load %arg8[%c0_26, %c0_27] : memref<128x1xf32, #tpu.memory_space<vmem>>, vector<128x1xf32>
      tpu.vector_store %arg8[%c0_26, %c0_27], %38 {strides = array<i32>} : memref<128x1xf32, #tpu.memory_space<vmem>>, vector<128x1xf32>,
      %cst_28 = arith.constant 0xFF800000 : f32
      %40 = vector.broadcast %cst_28 : f32 to vector<128x1xf32>
      %c0_29 = arith.constant 0 : index
      %c0_30 = arith.constant 0 : index
      %41 = vector.load %arg9[%c0_29, %c0_30] : memref<128x1xf32, #tpu.memory_space<vmem>>, vector<128x1xf32>
      tpu.vector_store %arg9[%c0_29, %c0_30], %40 {strides = array<i32>} : memref<128x1xf32, #tpu.memory_space<vmem>>, vector<128x1xf32>,
    } else {
    }
    %c0 = arith.constant 0 : index
    %c0_1 = arith.constant 0 : index
    %c0_2 = arith.constant 0 : index
    %3 = vector.load %arg2[%c0, %c0_1, %c0_2] : memref<1x8x256xbf16, #tpu.memory_space<vmem>>, vector<1x8x256xbf16>
    %4 = vector.shape_cast %3 : vector<1x8x256xbf16> to vector<8x256xbf16>
    %c0_3 = arith.constant 0 : index
    %c0_4 = arith.constant 0 : index
    %5 = vector.load %arg3[%c0_3, %c0_4] : memref<256x8xbf16, #tpu.memory_space<vmem>>, vector<256x8xbf16>
    %cst = arith.constant dense<0.000000e+00> : vector<256x256xf32>
    %6 = tpu.matmul %5, %4, %cst {dimension_numbers = #tpu.dot_dimension_numbers<[1], [0], [0], [1], [0, 0, 1, 1], [], []>} : vector<256x8xbf16>, vector<8x256xbf16>, vector<256x256xf32> -> vector<256x256xf32>
    %7 = vector.extract_strided_slice %6 {offsets = [0, 0], sizes = [128, 256], strides = [1, 1]} : vector<256x256xf32> to vector<128x256xf32>
    %8 = vector.extract_strided_slice %6 {offsets = [128, 0], sizes = [128, 256], strides = [1, 1]} : vector<256x256xf32> to vector<128x256xf32>
    %c0_5 = arith.constant 0 : index
    %c0_6 = arith.constant 0 : index
    %9 = vector.load %arg9[%c0_5, %c0_6] : memref<128x1xf32, #tpu.memory_space<vmem>>, vector<128x1xf32>
    %cst_7 = arith.constant dense<0xFF800000> : vector<128xf32>
    %10 = vector.multi_reduction <maximumf>, %7, %cst_7 [1] : vector<128x256xf32> to vector<128xf32>
    %11 = vector.shape_cast %10 : vector<128xf32> to vector<128x1xf32>
    %12 = arith.maximumf %9, %11 : vector<128x1xf32>
    %13 = arith.subf %9, %12 : vector<128x1xf32>
    %14 = math.exp %13 : vector<128x1xf32>
    %15 = vector.broadcast %12 : vector<128x1xf32> to vector<128x256xf32>
    %16 = arith.subf %7, %15 : vector<128x256xf32>
    %17 = math.exp %16 : vector<128x256xf32>
    %c0_8 = arith.constant 0 : index
    %c0_9 = arith.constant 0 : index
    %18 = vector.load %arg7[%c0_8, %c0_9] : memref<128x128xf32, #tpu.memory_space<vmem>>, vector<128x128xf32>
    %19 = vector.broadcast %14 : vector<128x1xf32> to vector<128x128xf32>
    %20 = arith.mulf %18, %19 : vector<128x128xf32>
    %21 = arith.truncf %17 : vector<128x256xf32> to vector<128x256xbf16>
    %22 = arith.truncf %8 : vector<128x256xf32> to vector<128x256xbf16>
    %cst_10 = arith.constant dense<0.000000e+00> : vector<128x128xf32>
    %23 = tpu.matmul %21, %22, %cst_10 {dimension_numbers = #tpu.dot_dimension_numbers<[1], [1], [0], [0], [0, 0, 1, 0], [], []>} : vector<128x256xbf16>, vector<128x256xbf16>, vector<128x128xf32> -> vector<128x128xf32>
    %24 = arith.addf %20, %23 : vector<128x128xf32>
    %c0_11 = arith.constant 0 : index
    %c0_12 = arith.constant 0 : index
    %25 = vector.load %arg7[%c0_11, %c0_12] : memref<128x128xf32, #tpu.memory_space<vmem>>, vector<128x128xf32>
    tpu.vector_store %arg7[%c0_11, %c0_12], %24 {strides = array<i32>} : memref<128x128xf32, #tpu.memory_space<vmem>>, vector<128x128xf32>,
    %c0_13 = arith.constant 0 : index
    %c0_14 = arith.constant 0 : index
    %26 = vector.load %arg8[%c0_13, %c0_14] : memref<128x1xf32, #tpu.memory_space<vmem>>, vector<128x1xf32>
    %27 = arith.mulf %26, %14 : vector<128x1xf32>
    %cst_15 = arith.constant dense<0.000000e+00> : vector<128xf32>
    %28 = vector.multi_reduction <add>, %17, %cst_15 [1] : vector<128x256xf32> to vector<128xf32>
    %29 = vector.shape_cast %28 : vector<128xf32> to vector<128x1xf32>
    %30 = arith.addf %27, %29 : vector<128x1xf32>
    %c0_16 = arith.constant 0 : index
    %c0_17 = arith.constant 0 : index
    %31 = vector.load %arg8[%c0_16, %c0_17] : memref<128x1xf32, #tpu.memory_space<vmem>>, vector<128x1xf32>
    tpu.vector_store %arg8[%c0_16, %c0_17], %30 {strides = array<i32>} : memref<128x1xf32, #tpu.memory_space<vmem>>, vector<128x1xf32>,
    %c0_18 = arith.constant 0 : index
    %c0_19 = arith.constant 0 : index
    %32 = vector.load %arg9[%c0_18, %c0_19] : memref<128x1xf32, #tpu.memory_space<vmem>>, vector<128x1xf32>
    tpu.vector_store %arg9[%c0_18, %c0_19], %12 {strides = array<i32>} : memref<128x1xf32, #tpu.memory_space<vmem>>, vector<128x1xf32>,
    %c0_i32_20 = arith.constant 0 : i32
    %33 = arith.cmpi eq, %arg1, %c0_i32_20 : i32
    %34 = arith.extui %33 : i1 to i32
    %c0_i32_21 = arith.constant 0 : i32
    %35 = arith.cmpi ne, %34, %c0_i32_21 : i32
    scf.if %35 {
      %c0_22 = arith.constant 0 : index
      %c0_23 = arith.constant 0 : index
      %36 = vector.load %arg8[%c0_22, %c0_23] : memref<128x1xf32, #tpu.memory_space<vmem>>, vector<128x1xf32>
      %37 = tpu.reciprocal %36 {approx = true} : vector<128x1xf32> -> vector<128x1xf32>
      %c0_24 = arith.constant 0 : index
      %c0_25 = arith.constant 0 : index
      %38 = vector.load %arg7[%c0_24, %c0_25] : memref<128x128xf32, #tpu.memory_space<vmem>>, vector<128x128xf32>
      %39 = vector.broadcast %37 : vector<128x1xf32> to vector<128x128xf32>
      %40 = arith.mulf %38, %39 : vector<128x128xf32>
      %c0_26 = arith.constant 0 : index
      %c0_27 = arith.constant 0 : index
      %41 = vector.load %arg5[%c0_26, %c0_27] : memref<128x128xf32, #tpu.memory_space<vmem>>, vector<128x128xf32>
      %42 = arith.mulf %40, %41 : vector<128x128xf32>
      %c0_28 = arith.constant 0 : index
      %c0_29 = arith.constant 0 : index
      %43 = vector.load %arg4[%c0_28, %c0_29] : memref<8x128xbf16, #tpu.memory_space<vmem>>, vector<8x128xbf16>
      %44 = arith.truncf %42 : vector<128x128xf32> to vector<128x128xbf16>
      %cst_30 = arith.constant dense<0.000000e+00> : vector<8x128xf32>
      %45 = tpu.matmul %43, %44, %cst_30 {dimension_numbers = #tpu.dot_dimension_numbers<[1], [1], [0], [0], [0, 0, 1, 0], [], []>} : vector<8x128xbf16>, vector<128x128xbf16>, vector<8x128xf32> -> vector<8x128xf32>
      %46 = arith.truncf %45 : vector<8x128xf32> to vector<8x128xbf16>
      %c0_31 = arith.constant 0 : index
      %c0_32 = arith.constant 0 : index
      %c0_33 = arith.constant 0 : index
      %47 = vector.load %arg6[%c0_31, %c0_32, %c0_33] : memref<1x8x128xbf16, #tpu.memory_space<vmem>>, vector<1x8x128xbf16>
      %48 = vector.shape_cast %47 : vector<1x8x128xbf16> to vector<8x128xbf16>
      %49 = vector.shape_cast %46 : vector<8x128xbf16> to vector<1x8x128xbf16>
      tpu.vector_store %arg6[%c0_31, %c0_32, %c0_33], %49 {strides = array<i32>} : memref<1x8x128xbf16, #tpu.memory_space<vmem>>, vector<1x8x128xbf16>,
    } else {
    }
    return
  }
  func.func @transform_0(%arg0: i32, %arg1: i32) -> (i32, i32, i32) {
    %c0_i32 = arith.constant 0 : i32
    %c0_i32_0 = arith.constant 0 : i32
    return %arg0, %c0_i32, %arg1 : i32, i32, i32
  }
  func.func @transform_1(%arg0: i32, %arg1: i32) -> (i32, i32) {
    %c0_i32 = arith.constant 0 : i32
    %c0_i32_0 = arith.constant 0 : i32
    %c0_i32_1 = arith.constant 0 : i32
    return %c0_i32, %c0_i32_0 : i32, i32
  }
  func.func @transform_2(%arg0: i32, %arg1: i32) -> (i32, i32) {
    %c0_i32 = arith.constant 0 : i32
    %c0_i32_0 = arith.constant 0 : i32
    %c0_i32_1 = arith.constant 0 : i32
    return %c0_i32, %c0_i32_0 : i32, i32
  }
  func.func @transform_3(%arg0: i32, %arg1: i32) -> (i32, i32) {
    %c0_i32 = arith.constant 0 : i32
    %c0_i32_0 = arith.constant 0 : i32
    %c0_i32_1 = arith.constant 0 : i32
    return %c0_i32, %c0_i32_0 : i32, i32
  }
  func.func @transform_4(%arg0: i32, %arg1: i32) -> (i32, i32, i32) {
    %c0_i32 = arith.constant 0 : i32
    %c0_i32_0 = arith.constant 0 : i32
    %c0_i32_1 = arith.constant 0 : i32
    return %arg0, %c0_i32, %c0_i32_0 : i32, i32, i32
  }
}

</mosaic_0001>

<llo_original>
// kernel: tpu_custom_call.1
$region0: #{tpu_custom_call.1}
  #allocation0 [shape = 'u32[]', space=smem, size = 0x4, offset = 0x4, fixed_abs, tag = 'smem constant byte address 0x4 - core index']
  #allocation1 [shape = 'u32[72,128]{1,0:T(1,128)}', space=vmem, size = 0x9000, scoped, tag = 'internal scratch']
  #allocation2 [shape = 'f32[128,128]{1,0:T(8,128)}', space=vmem, size = 0x10000, scoped, tag = 'scratch operand']
  #allocation3 [shape = 'f32[128,1]{1,0:T(8,128)}', space=vmem, size = 0x10000, scoped, tag = 'scratch operand']
  #allocation4 [shape = 'f32[128,1]{1,0:T(8,128)}', space=vmem, size = 0x10000, scoped, tag = 'scratch operand']
  %s0 = inlined_call_operand.hbm [shape: bf16[2,8,256], index: 0, kind: input, shape index: {}]
  %s1 = inlined_call_operand.vmem [shape: bf16[256,8], index: 1, kind: input, shape index: {}]
  %s2 = inlined_call_operand.vmem [shape: bf16[8,128], index: 2, kind: input, shape index: {}]
  %s3 = inlined_call_operand.vmem [shape: f32[128,128], index: 3, kind: input, shape index: {}]
  %s4 = inlined_call_operand.hbm [shape: bf16[2,8,128], index: 4, kind: output, shape index: {}]
  %s5 = sld [smem:[#allocation0]]
  $region61: #{tpu_custom_call.1} parent=0
    _
  %s7 = ssub.s32 1, %s5
  %s8 = scalar_select 0, %s7, %s5
  $region1: #{tpu_custom_call.1} parent=0
    #allocation5 [shape = 'u8[8192]{0}', space=vmem, size = 0x2000, scoped, tag = 'input window, operand 0']
    #allocation6 [shape = 's32[2]{0}', space=sflag, size = 0x8, scoped, tag = 'scoped memory for tpu_custom_call.1']
    #allocation7 [shape = 's32[2]{0}', space=sflag, size = 0x8, scoped, tag = 'scoped memory for tpu_custom_call.1']
    #allocation8 [shape = 'u8[4096]{0}', space=vmem, size = 0x1000, scoped, tag = 'output window, operand 0']
    %9 = vsyncpa [#allocation6], 0
    %s10 = scalar_lea.sflag [#allocation6], 1
    %11 = vsyncpa %s10, 0
    %12 = vsyncpa [#allocation7], 0
    %s13 = scalar_lea.sflag [#allocation7], 1
    %14 = vsyncpa %s13, 0
    loop: start=0, step=1, limit=4
    $region2: #{tpu_custom_call.1} parent=1 // loop_pre_header
      _
    $region3: #{tpu_custom_call.1} parent=1 // loop_header
      %s16 = sphi 0, %s20
      %p17 = scmp.ge.s32.totalorder %s16, 4
      %s23 = sphi 0, %s35
      %s24 = sphi 0, %s31
      %s25 = sphi 0, %s23
      %s26 = sphi 0, %s24
      %s27 = sphi 0, %s25
      %s28 = sphi 0, %s26
      %s40 = sphi 0, %s42
      %s43 = sphi 0, %s40
      %s44 = sphi 0, %s43
      %s60 = sphi 0, %s44
      %s64 = sphi 0, %s64
      %s66 = sphi 0, %s64
      %s67 = sphi 0, %s66
      %s81 = sphi 0, %s67
      %s85 = sphi 0, %s85
      %s87 = sphi 0, %s85
      %s88 = sphi 0, %s87
      %s102 = sphi 0, %s88
      %s106 = sphi 0, %s106
      %s108 = sphi 0, %s106
      %s109 = sphi 0, %s108
      %s123 = sphi 0, %s109
      %s129 = sphi 0, %s131
      %s132 = sphi 0, %s129
      %s133 = sphi 0, %s132
      %s149 = sphi 0, %s133
    $region4: #{tpu_custom_call.1} parent=1 // loop_header_branch
      %19 = sbr.rel (%p17) target = $region8
    $region5: #{tpu_custom_call.1} parent=1 // loop_body
      %s21 = ssub.s32 %s16, 1
      %s22 = ssub.s32 %s16, 2
      %s29 = sadd.s32 1, %s24
      %p30 = scmp.ge.s32.totalorder %s29, 1
      %s31 = scalar_select %p30, 0, %s29
      %s32 = sadd.s32 1, %s23
      %s33 = scalar_select %p30, %s32, %s23
      %p34 = scmp.ge.s32.totalorder %s33, 2
      %s35 = scalar_select %p34, 0, %s33
      %s36 = ssub.s32 %s23, %s35
      %s37 = ssub.s32 %s24, %s31
      %s38 = sor.u32 %s36, %s37
      %p39 = scmp.eq.s32.totalorder %s38, 0
      %s41 = sadd.s32 %s40, 1
      %s42 = scalar_select %p39, %s40, %s41
      %p45 = pneg %p39
      %p46 = scmp.eq.s32.totalorder %s16, 1
      %p47 = por %p45, %p46
      %p48 = scmp.ne.s32.totalorder %s40, %s43
      %p49 = scmp.eq.s32.totalorder %s16, 0
      %p50 = por %p48, %p49
      %p51 = scmp.ne.s32.totalorder %s40, %s43
      %p52 = scmp.eq.s32.totalorder %s21, 1
      %p53 = por %p51, %p52
      %p54 = scmp.ne.s32.totalorder %s43, %s44
      %p55 = scmp.eq.s32.totalorder %s21, 0
      %p56 = por %p54, %p55
      %p57 = scmp.ne.s32.totalorder %s43, %s44
      %p58 = scmp.eq.s32.totalorder %s22, 1
      %p59 = por %p57, %p58
      %p61 = scmp.ne.s32.totalorder %s44, %s60
      %p62 = scmp.eq.s32.totalorder %s22, 0
      %p63 = por %p61, %p62
      %s65 = sadd.s32 %s64, 1
      %p68 = scmp.eq.s32.totalorder %s16, 1
      %p69 = scmp.ne.s32.totalorder %s64, %s66
      %p70 = scmp.eq.s32.totalorder %s16, 0
      %p71 = por %p69, %p70
      %p72 = scmp.ne.s32.totalorder %s64, %s66
      %p73 = scmp.eq.s32.totalorder %s21, 1
      %p74 = por %p72, %p73
      %p75 = scmp.ne.s32.totalorder %s66, %s67
      %p76 = scmp.eq.s32.totalorder %s21, 0
      %p77 = por %p75, %p76
      %p78 = scmp.ne.s32.totalorder %s66, %s67
      %p79 = scmp.eq.s32.totalorder %s22, 1
      %p80 = por %p78, %p79
      %p82 = scmp.ne.s32.totalorder %s67, %s81
      %p83 = scmp.eq.s32.totalorder %s22, 0
      %p84 = por %p82, %p83
      %s86 = sadd.s32 %s85, 1
      %p89 = scmp.eq.s32.totalorder %s16, 1
      %p90 = scmp.ne.s32.totalorder %s85, %s87
      %p91 = scmp.eq.s32.totalorder %s16, 0
      %p92 = por %p90, %p91
      %p93 = scmp.ne.s32.totalorder %s85, %s87
      %p94 = scmp.eq.s32.totalorder %s21, 1
      %p95 = por %p93, %p94
      %p96 = scmp.ne.s32.totalorder %s87, %s88
      %p97 = scmp.eq.s32.totalorder %s21, 0
      %p98 = por %p96, %p97
      %p99 = scmp.ne.s32.totalorder %s87, %s88
      %p100 = scmp.eq.s32.totalorder %s22, 1
      %p101 = por %p99, %p100
      %p103 = scmp.ne.s32.totalorder %s88, %s102
      %p104 = scmp.eq.s32.totalorder %s22, 0
      %p105 = por %p103, %p104
      %s107 = sadd.s32 %s106, 1
      %p110 = scmp.eq.s32.totalorder %s16, 1
      %p111 = scmp.ne.s32.totalorder %s106, %s108
      %p112 = scmp.eq.s32.totalorder %s16, 0
      %p113 = por %p111, %p112
      %p114 = scmp.ne.s32.totalorder %s106, %s108
      %p115 = scmp.eq.s32.totalorder %s21, 1
      %p116 = por %p114, %p115
      %p117 = scmp.ne.s32.totalorder %s108, %s109
      %p118 = scmp.eq.s32.totalorder %s21, 0
      %p119 = por %p117, %p118
      %p120 = scmp.ne.s32.totalorder %s108, %s109
      %p121 = scmp.eq.s32.totalorder %s22, 1
      %p122 = por %p120, %p121
      %p124 = scmp.ne.s32.totalorder %s109, %s123
      %p125 = scmp.eq.s32.totalorder %s22, 0
      %p126 = por %p124, %p125
      %s127 = ssub.s32 %s23, %s35
      %p128 = scmp.eq.s32.totalorder %s127, 0
      %s130 = sadd.s32 %s129, 1
      %s131 = scalar_select %p128, %s129, %s130
      %p134 = pneg %p128
      %p135 = scmp.eq.s32.totalorder %s16, 1
      %p136 = por %p134, %p135
      %p137 = scmp.ne.s32.totalorder %s129, %s132
      %p138 = scmp.eq.s32.totalorder %s16, 0
      %p139 = por %p137, %p138
      %p140 = scmp.ne.s32.totalorder %s129, %s132
      %p141 = scmp.eq.s32.totalorder %s21, 1
      %p142 = por %p140, %p141
      %p143 = scmp.ne.s32.totalorder %s132, %s133
      %p144 = scmp.eq.s32.totalorder %s21, 0
      %p145 = por %p143, %p144
      %p146 = scmp.ne.s32.totalorder %s132, %s133
      %p147 = scmp.eq.s32.totalorder %s22, 1
      %p148 = por %p146, %p147
      %p150 = scmp.ne.s32.totalorder %s133, %s149
      %p151 = scmp.eq.s32.totalorder %s22, 0
      %p152 = por %p150, %p151
      %p153 = scmp.le.s32.totalorder 1, %s16
      %p154 = scmp.lt.s32.totalorder %s16, 3
      %p155 = pnand %p153, %p154
      %p156 = pneg %p155
      // Predicated region
      $region9: #{tpu_custom_call.1} parent=5 // pred_check
        _
      $region10: #{tpu_custom_call.1} parent=5 // pred_check_branch
        %158 = sbr.rel (%p155) target = $region12
      $region11: #{tpu_custom_call.1} parent=5 // pred_region
        %s159 = ssub.s32 %s16, 1
        // Predicated region
        $region13: #{tpu_custom_call.1} parent=11 // pred_check
          %p160 = pneg %p77
        $region14: #{tpu_custom_call.1} parent=11 // pred_check_branch
          %162 = sbr.rel (%p160) target = $region16
        $region15: #{tpu_custom_call.1} parent=11 // pred_region
          _
        $region16: #{tpu_custom_call.1} parent=11 // pred_fallthru
          _
        // Predicated region
        $region17: #{tpu_custom_call.1} parent=11 // pred_check
          %p163 = pneg %p98
        $region18: #{tpu_custom_call.1} parent=11 // pred_check_branch
          %165 = sbr.rel (%p163) target = $region20
        $region19: #{tpu_custom_call.1} parent=11 // pred_region
          _
        $region20: #{tpu_custom_call.1} parent=11 // pred_fallthru
          _
        // Predicated region
        $region21: #{tpu_custom_call.1} parent=11 // pred_check
          %p166 = pneg %p119
        $region22: #{tpu_custom_call.1} parent=11 // pred_check_branch
          %168 = sbr.rel (%p166) target = $region24
        $region23: #{tpu_custom_call.1} parent=11 // pred_region
          _
        $region24: #{tpu_custom_call.1} parent=11 // pred_fallthru
          _
      $region12: #{tpu_custom_call.1} parent=5 // pred_fallthru
        _
      %p169 = scmp.lt.s32.totalorder %s16, 2
      // Predicated region
      $region25: #{tpu_custom_call.1} parent=5 // pred_check
        %p170 = pneg %p169
      $region26: #{tpu_custom_call.1} parent=5 // pred_check_branch
        %172 = sbr.rel (%p170) target = $region28
      $region27: #{tpu_custom_call.1} parent=5 // pred_region
        // Predicated region
        $region29: #{tpu_custom_call.1} parent=27 // pred_check
          %p173 = pneg %p50
        $region30: #{tpu_custom_call.1} parent=27 // pred_check_branch
          %175 = sbr.rel (%p173) target = $region32
        $region31: #{tpu_custom_call.1} parent=27 // pred_region
          %s176 = sand.u32 %s40, 1
          %s177 = scalar_lea.sflag [#allocation6], %s176
          %s178 = sand.u32 %s40, 1
          %s179 = smul.addr %s178, 8
          %s180 = scalar_lea.vmem [#allocation5], %s179
          %s181 = smul.u32 2, %s24
          %183 = vsyncadd %s177, 0
          %s184 = smul.addr %s23, 2
          %s185 = sadd.s32 %s181, %s184
          %s186 = smul.addr %s185, 4
          %s187 = scalar_lea.hbm %s0, %s186
          %s189 = sshll.u32 %s187, 4
          %s190 = int_to_ptr.hbm [resolvable:$true] %s189
          %s191 = sshll.u32 %s180, 4
          %s192 = int_to_ptr.vmem [resolvable:$true] %s191
          %194 = dma.hbm_to_vmem [thread:$0]  %s190, 128, %s192, %s177
        $region32: #{tpu_custom_call.1} parent=27 // pred_fallthru
          _
      $region28: #{tpu_custom_call.1} parent=5 // pred_fallthru
        _
      %p195 = scmp.le.s32.totalorder 1, %s16
      %p196 = scmp.lt.s32.totalorder %s16, 3
      %p197 = pnand %p195, %p196
      %p198 = pneg %p197
      // Predicated region
      $region33: #{tpu_custom_call.1} parent=5 // pred_check
        _
      $region34: #{tpu_custom_call.1} parent=5 // pred_check_branch
        %200 = sbr.rel (%p197) target = $region36
      $region35: #{tpu_custom_call.1} parent=5 // pred_region
        %s201 = ssub.s32 %s16, 1
        %s202 = sand.u32 %s43, 1
        %s203 = scalar_lea.sflag [#allocation6], %s202
        %s204 = sand.u32 %s43, 1
        %s205 = smul.addr %s204, 8
        %s206 = scalar_lea.vmem [#allocation5], %s205
        // Predicated region
        $region37: #{tpu_custom_call.1} parent=35 // pred_check
          %p207 = pneg %p56
        $region38: #{tpu_custom_call.1} parent=35 // pred_check_branch
          %209 = sbr.rel (%p207) target = $region40
        $region39: #{tpu_custom_call.1} parent=35 // pred_region
          %211 = dma.done %s203, 128
        $region40: #{tpu_custom_call.1} parent=35 // pred_fallthru
          _
        %s212 = sand.u32 %s43, 1
        %s213 = scalar_lea.sflag [#allocation6], %s212
        %s214 = sand.u32 %s43, 1
        %s215 = smul.addr %s214, 8
        %s216 = scalar_lea.vmem [#allocation5], %s215
        %p217 = pneg %p56
        %p218 = pneg %p53
        %p219 = pneg %p77
        %p220 = pneg %p74
        %p221 = pneg %p98
        %p222 = pneg %p95
        %p223 = pneg %p119
        %p224 = pneg %p116
        %p225 = pneg %p145
        %p226 = pneg %p142
        %s227 = sand.u32 %s132, 1
        %s228 = scalar_lea.sflag [#allocation7], %s227
        %s229 = sand.u32 %s132, 1
        %s230 = smul.addr %s229, 4
        %s231 = scalar_lea.vmem [#allocation8], %s230
        %s232 = smul.u32 2, %s26
        %p234 = scmp.eq.s32.totalorder %s26, 0
        // Predicated region
        $region41: #{tpu_custom_call.1} parent=35 // pred_check
          %p235 = pneg %p234
        $region42: #{tpu_custom_call.1} parent=35 // pred_check_branch
          %237 = sbr.rel (%p235) target = $region44
        $region43: #{tpu_custom_call.1} parent=35 // pred_region
          %238 = vst [vmem:[#allocation2] sm:$0xff] 0.0
          %239 = vst [vmem:[#allocation2 + $0x8] sm:$0xff] 0.0
          %240 = vst [vmem:[#allocation2 + $0x10] sm:$0xff] 0.0
          %241 = vst [vmem:[#allocation2 + $0x18] sm:$0xff] 0.0
          %242 = vst [vmem:[#allocation2 + $0x20] sm:$0xff] 0.0
          %243 = vst [vmem:[#allocation2 + $0x28] sm:$0xff] 0.0
          %244 = vst [vmem:[#allocation2 + $0x30] sm:$0xff] 0.0
          %245 = vst [vmem:[#allocation2 + $0x38] sm:$0xff] 0.0
          %246 = vst [vmem:[#allocation2 + $0x40] sm:$0xff] 0.0
          %247 = vst [vmem:[#allocation2 + $0x48] sm:$0xff] 0.0
          %248 = vst [vmem:[#allocation2 + $0x50] sm:$0xff] 0.0
          %249 = vst [vmem:[#allocation2 + $0x58] sm:$0xff] 0.0
          %250 = vst [vmem:[#allocation2 + $0x60] sm:$0xff] 0.0
          %251 = vst [vmem:[#allocation2 + $0x68] sm:$0xff] 0.0
          %252 = vst [vmem:[#allocation2 + $0x70] sm:$0xff] 0.0
          %253 = vst [vmem:[#allocation2 + $0x78] sm:$0xff] 0.0
          %vm254 = vcmask 7168
          %255 = vst.msk [vmem:[#allocation3] sm:$0xff] %vm254, 0.0
          %256 = vst.msk [vmem:[#allocation3 + $0x8] sm:$0xff] %vm254, 0.0
          %257 = vst.msk [vmem:[#allocation3 + $0x10] sm:$0xff] %vm254, 0.0
          %258 = vst.msk [vmem:[#allocation3 + $0x18] sm:$0xff] %vm254, 0.0
          %259 = vst.msk [vmem:[#allocation3 + $0x20] sm:$0xff] %vm254, 0.0
          %260 = vst.msk [vmem:[#allocation3 + $0x28] sm:$0xff] %vm254, 0.0
          %261 = vst.msk [vmem:[#allocation3 + $0x30] sm:$0xff] %vm254, 0.0
          %262 = vst.msk [vmem:[#allocation3 + $0x38] sm:$0xff] %vm254, 0.0
          %263 = vst.msk [vmem:[#allocation3 + $0x40] sm:$0xff] %vm254, 0.0
          %264 = vst.msk [vmem:[#allocation3 + $0x48] sm:$0xff] %vm254, 0.0
          %265 = vst.msk [vmem:[#allocation3 + $0x50] sm:$0xff] %vm254, 0.0
          %266 = vst.msk [vmem:[#allocation3 + $0x58] sm:$0xff] %vm254, 0.0
          %267 = vst.msk [vmem:[#allocation3 + $0x60] sm:$0xff] %vm254, 0.0
          %268 = vst.msk [vmem:[#allocation3 + $0x68] sm:$0xff] %vm254, 0.0
          %269 = vst.msk [vmem:[#allocation3 + $0x70] sm:$0xff] %vm254, 0.0
          %270 = vst.msk [vmem:[#allocation3 + $0x78] sm:$0xff] %vm254, 0.0
          %271 = vst.msk [vmem:[#allocation4] sm:$0xff] %vm254, -inf
          %272 = vst.msk [vmem:[#allocation4 + $0x8] sm:$0xff] %vm254, -inf
          %273 = vst.msk [vmem:[#allocation4 + $0x10] sm:$0xff] %vm254, -inf
          %274 = vst.msk [vmem:[#allocation4 + $0x18] sm:$0xff] %vm254, -inf
          %275 = vst.msk [vmem:[#allocation4 + $0x20] sm:$0xff] %vm254, -inf
          %276 = vst.msk [vmem:[#allocation4 + $0x28] sm:$0xff] %vm254, -inf
          %277 = vst.msk [vmem:[#allocation4 + $0x30] sm:$0xff] %vm254, -inf
          %278 = vst.msk [vmem:[#allocation4 + $0x38] sm:$0xff] %vm254, -inf
          %279 = vst.msk [vmem:[#allocation4 + $0x40] sm:$0xff] %vm254, -inf
          %280 = vst.msk [vmem:[#allocation4 + $0x48] sm:$0xff] %vm254, -inf
          %281 = vst.msk [vmem:[#allocation4 + $0x50] sm:$0xff] %vm254, -inf
          %282 = vst.msk [vmem:[#allocation4 + $0x58] sm:$0xff] %vm254, -inf
          %283 = vst.msk [vmem:[#allocation4 + $0x60] sm:$0xff] %vm254, -inf
          %284 = vst.msk [vmem:[#allocation4 + $0x68] sm:$0xff] %vm254, -inf
          %285 = vst.msk [vmem:[#allocation4 + $0x70] sm:$0xff] %vm254, -inf
          %286 = vst.msk [vmem:[#allocation4 + $0x78] sm:$0xff] %vm254, -inf
        $region44: #{tpu_custom_call.1} parent=35 // pred_fallthru
          _
        %v287 = vld [vmem:[%s206] sm:$0xff]
        %v288 = vld [vmem:[%s1] sm:$0xf]
        %v289 = vld [vmem:[%s1 + $0x4] sm:$0xf]
        %v290 = vld [vmem:[%s1 + $0x8] sm:$0xf]
        %v291 = vld [vmem:[%s1 + $0xc] sm:$0xf]
        %v292 = vld [vmem:[%s1 + $0x10] sm:$0xf]
        %v293 = vld [vmem:[%s1 + $0x14] sm:$0xf]
        %v294 = vld [vmem:[%s1 + $0x18] sm:$0xf]
        %v295 = vld [vmem:[%s1 + $0x1c] sm:$0xf]
        %v296 = vld [vmem:[%s1 + $0x20] sm:$0xf]
        %v297 = vld [vmem:[%s1 + $0x24] sm:$0xf]
        %v298 = vld [vmem:[%s1 + $0x28] sm:$0xf]
        %v299 = vld [vmem:[%s1 + $0x2c] sm:$0xf]
        %v300 = vld [vmem:[%s1 + $0x30] sm:$0xf]
        %v301 = vld [vmem:[%s1 + $0x34] sm:$0xf]
        %v302 = vld [vmem:[%s1 + $0x38] sm:$0xf]
        %v303 = vld [vmem:[%s1 + $0x3c] sm:$0xf]
        %v304 = vld [vmem:[%s1 + $0x40] sm:$0xf]
        %v305 = vld [vmem:[%s1 + $0x44] sm:$0xf]
        %v306 = vld [vmem:[%s1 + $0x48] sm:$0xf]
        %v307 = vld [vmem:[%s1 + $0x4c] sm:$0xf]
        %v308 = vld [vmem:[%s1 + $0x50] sm:$0xf]
        %v309 = vld [vmem:[%s1 + $0x54] sm:$0xf]
        %v310 = vld [vmem:[%s1 + $0x58] sm:$0xf]
        %v311 = vld [vmem:[%s1 + $0x5c] sm:$0xf]
        %v312 = vld [vmem:[%s1 + $0x60] sm:$0xf]
        %v313 = vld [vmem:[%s1 + $0x64] sm:$0xf]
        %v314 = vld [vmem:[%s1 + $0x68] sm:$0xf]
        %v315 = vld [vmem:[%s1 + $0x6c] sm:$0xf]
        %v316 = vld [vmem:[%s1 + $0x70] sm:$0xf]
        %v317 = vld [vmem:[%s1 + $0x74] sm:$0xf]
        %v318 = vld [vmem:[%s1 + $0x78] sm:$0xf]
        %v319 = vld [vmem:[%s1 + $0x7c] sm:$0xf]
        %v352 = vunpack.c.l.b16 %v288
        %v353 = vunpack.c.l.b16 %v289
        %v354 = vunpack.c.l.b16 %v290
        %v355 = vunpack.c.l.b16 %v291
        %v356 = vunpack.c.l.b16 %v292
        %v357 = vunpack.c.l.b16 %v293
        %v358 = vunpack.c.l.b16 %v294
        %v359 = vunpack.c.l.b16 %v295
        %v360 = vunpack.c.l.b16 %v296
        %v361 = vunpack.c.l.b16 %v297
        %v362 = vunpack.c.l.b16 %v298
        %v363 = vunpack.c.l.b16 %v299
        %v364 = vunpack.c.l.b16 %v300
        %v365 = vunpack.c.l.b16 %v301
        %v366 = vunpack.c.l.b16 %v302
        %v367 = vunpack.c.l.b16 %v303
        %v368 = vunpack.c.l.b16 %v304
        %v369 = vunpack.c.l.b16 %v305
        %v370 = vunpack.c.l.b16 %v306
        %v371 = vunpack.c.l.b16 %v307
        %v372 = vunpack.c.l.b16 %v308
        %v373 = vunpack.c.l.b16 %v309
        %v374 = vunpack.c.l.b16 %v310
        %v375 = vunpack.c.l.b16 %v311
        %v376 = vunpack.c.l.b16 %v312
        %v377 = vunpack.c.l.b16 %v313
        %v378 = vunpack.c.l.b16 %v314
        %v379 = vunpack.c.l.b16 %v315
        %v380 = vunpack.c.l.b16 %v316
        %v381 = vunpack.c.l.b16 %v317
        %v382 = vunpack.c.l.b16 %v318
        %v383 = vunpack.c.l.b16 %v319
        %v384 = vpack.c.b16 %v353, %v352
        %v385 = vpack.c.b16 %v355, %v354
        %v386 = vpack.c.b16 %v357, %v356
        %v387 = vpack.c.b16 %v359, %v358
        %v388 = vpack.c.b16 %v361, %v360
        %v389 = vpack.c.b16 %v363, %v362
        %v390 = vpack.c.b16 %v365, %v364
        %v391 = vpack.c.b16 %v367, %v366
        %v392 = vpack.c.b16 %v369, %v368
        %v393 = vpack.c.b16 %v371, %v370
        %v394 = vpack.c.b16 %v373, %v372
        %v395 = vpack.c.b16 %v375, %v374
        %v396 = vpack.c.b16 %v377, %v376
        %v397 = vpack.c.b16 %v379, %v378
        %v398 = vpack.c.b16 %v381, %v380
        %v399 = vpack.c.b16 %v383, %v382
        %v401 = vunpack.c.l.b16 %v287
        %v402 = vunpack.c.h.b16 %v287
        %v403 = vpack.c.b16 %v401, %v401
        %v404 = vpack.c.b16 %v402, %v402
        %vm405 = vcmask 64512
        %v407 = vsel %vm405, %v384, 0
        %v410 = vsel %vm405, %v385, 0
        %v413 = vsel %vm405, %v386, 0
        %v416 = vsel %vm405, %v387, 0
        %v419 = vsel %vm405, %v388, 0
        %v422 = vsel %vm405, %v389, 0
        %v425 = vsel %vm405, %v390, 0
        %v428 = vsel %vm405, %v391, 0
        %v431 = vsel %vm405, %v392, 0
        %v434 = vsel %vm405, %v393, 0
        %v437 = vsel %vm405, %v394, 0
        %v440 = vsel %vm405, %v395, 0
        %v443 = vsel %vm405, %v396, 0
        %v446 = vsel %vm405, %v397, 0
        %v449 = vsel %vm405, %v398, 0
        %v452 = vsel %vm405, %v399, 0
        %vm454 = vcmask 1043456
        %v456 = vsel %vm454, %v403, 0
        %v459 = vsel %vm454, %v404, 0
        %461 = vmatpush.bf16.msra.mxu0 0
        %462 = vmatpush.bf16.msra.mxu0 0
        %463 = vmatpush.bf16.msra.mxu0 0
        %464 = vmatpush.bf16.msra.mxu0 0
        %465 = vmatpush.bf16.msra.mxu0 0
        %466 = vmatpush.bf16.msra.mxu0 0
        %467 = vmatpush.bf16.msra.mxu0 0
        %468 = vmatpush.bf16.msra.mxu0 %v456
        %469 = vmatmul.bf16.gmra.mxu0 %v407
        %v470 = vpop.f32.mrf.mxu0
        %v471 = vadd.f32 0.0, %v470
        %v472 = vpop.f32.mrf.mxu0
        %v473 = vadd.f32 0.0, %v472
        %474 = vmatmul.bf16.gmra.mxu0 %v410
        %v475 = vpop.f32.mrf.mxu0
        %v476 = vadd.f32 0.0, %v475
        %v477 = vpop.f32.mrf.mxu0
        %v478 = vadd.f32 0.0, %v477
        %479 = vmatmul.bf16.gmra.mxu0 %v413
        %v480 = vpop.f32.mrf.mxu0
        %v481 = vadd.f32 0.0, %v480
        %v482 = vpop.f32.mrf.mxu0
        %v483 = vadd.f32 0.0, %v482
        %484 = vmatmul.bf16.gmra.mxu0 %v416
        %v485 = vpop.f32.mrf.mxu0
        %v486 = vadd.f32 0.0, %v485
        %v487 = vpop.f32.mrf.mxu0
        %v488 = vadd.f32 0.0, %v487
        %489 = vmatmul.bf16.gmra.mxu0 %v419
        %v490 = vpop.f32.mrf.mxu0
        %v491 = vadd.f32 0.0, %v490
        %v492 = vpop.f32.mrf.mxu0
        %v493 = vadd.f32 0.0, %v492
        %494 = vmatmul.bf16.gmra.mxu0 %v422
        %v495 = vpop.f32.mrf.mxu0
        %v496 = vadd.f32 0.0, %v495
        %v497 = vpop.f32.mrf.mxu0
        %v498 = vadd.f32 0.0, %v497
        %499 = vmatmul.bf16.gmra.mxu0 %v425
        %v500 = vpop.f32.mrf.mxu0
        %v501 = vadd.f32 0.0, %v500
        %v502 = vpop.f32.mrf.mxu0
        %v503 = vadd.f32 0.0, %v502
        %504 = vmatmul.bf16.gmra.mxu0 %v428
        %v505 = vpop.f32.mrf.mxu0
        %v506 = vadd.f32 0.0, %v505
        %v507 = vpop.f32.mrf.mxu0
        %v508 = vadd.f32 0.0, %v507
        %509 = vmatmul.bf16.gmra.mxu0 %v431
        %v510 = vpop.f32.mrf.mxu0
        %v511 = vadd.f32 0.0, %v510
        %v512 = vpop.f32.mrf.mxu0
        %v513 = vadd.f32 0.0, %v512
        %514 = vmatmul.bf16.gmra.mxu0 %v434
        %v515 = vpop.f32.mrf.mxu0
        %v516 = vadd.f32 0.0, %v515
        %v517 = vpop.f32.mrf.mxu0
        %v518 = vadd.f32 0.0, %v517
        %519 = vmatmul.bf16.gmra.mxu0 %v437
        %v520 = vpop.f32.mrf.mxu0
        %v521 = vadd.f32 0.0, %v520
        %v522 = vpop.f32.mrf.mxu0
        %v523 = vadd.f32 0.0, %v522
        %524 = vmatmul.bf16.gmra.mxu0 %v440
        %v525 = vpop.f32.mrf.mxu0
        %v526 = vadd.f32 0.0, %v525
        %v527 = vpop.f32.mrf.mxu0
        %v528 = vadd.f32 0.0, %v527
        %529 = vmatmul.bf16.gmra.mxu0 %v443
        %v530 = vpop.f32.mrf.mxu0
        %v531 = vadd.f32 0.0, %v530
        %v532 = vpop.f32.mrf.mxu0
        %v533 = vadd.f32 0.0, %v532
        %534 = vmatmul.bf16.gmra.mxu0 %v446
        %v535 = vpop.f32.mrf.mxu0
        %v536 = vadd.f32 0.0, %v535
        %v537 = vpop.f32.mrf.mxu0
        %v538 = vadd.f32 0.0, %v537
        %539 = vmatmul.bf16.gmra.mxu0 %v449
        %v540 = vpop.f32.mrf.mxu0
        %v541 = vadd.f32 0.0, %v540
        %v542 = vpop.f32.mrf.mxu0
        %v543 = vadd.f32 0.0, %v542
        %544 = vmatmul.bf16.gmra.mxu0 %v452
        %v545 = vpop.f32.mrf.mxu0
        %v546 = vadd.f32 0.0, %v545
        %v547 = vpop.f32.mrf.mxu0
        %v548 = vadd.f32 0.0, %v547
        %549 = vdwg.mxu0
        %550 = vmatpush.bf16.msra.mxu0 0
        %551 = vmatpush.bf16.msra.mxu0 0
        %552 = vmatpush.bf16.msra.mxu0 0
        %553 = vmatpush.bf16.msra.mxu0 0
        %554 = vmatpush.bf16.msra.mxu0 0
        %555 = vmatpush.bf16.msra.mxu0 0
        %556 = vmatpush.bf16.msra.mxu0 0
        %557 = vmatpush.bf16.msra.mxu0 %v459
        %558 = vmatmul.bf16.gmra.mxu0 %v407
        %v559 = vpop.f32.mrf.mxu0
        %v560 = vadd.f32 0.0, %v559
        %v561 = vpop.f32.mrf.mxu0
        %v562 = vadd.f32 0.0, %v561
        %563 = vmatmul.bf16.gmra.mxu0 %v410
        %v564 = vpop.f32.mrf.mxu0
        %v565 = vadd.f32 0.0, %v564
        %v566 = vpop.f32.mrf.mxu0
        %v567 = vadd.f32 0.0, %v566
        %568 = vmatmul.bf16.gmra.mxu0 %v413
        %v569 = vpop.f32.mrf.mxu0
        %v570 = vadd.f32 0.0, %v569
        %v571 = vpop.f32.mrf.mxu0
        %v572 = vadd.f32 0.0, %v571
        %573 = vmatmul.bf16.gmra.mxu0 %v416
        %v574 = vpop.f32.mrf.mxu0
        %v575 = vadd.f32 0.0, %v574
        %v576 = vpop.f32.mrf.mxu0
        %v577 = vadd.f32 0.0, %v576
        %578 = vmatmul.bf16.gmra.mxu0 %v419
        %v579 = vpop.f32.mrf.mxu0
        %v580 = vadd.f32 0.0, %v579
        %v581 = vpop.f32.mrf.mxu0
        %v582 = vadd.f32 0.0, %v581
        %583 = vmatmul.bf16.gmra.mxu0 %v422
        %v584 = vpop.f32.mrf.mxu0
        %v585 = vadd.f32 0.0, %v584
        %v586 = vpop.f32.mrf.mxu0
        %v587 = vadd.f32 0.0, %v586
        %588 = vmatmul.bf16.gmra.mxu0 %v425
        %v589 = vpop.f32.mrf.mxu0
        %v590 = vadd.f32 0.0, %v589
        %v591 = vpop.f32.mrf.mxu0
        %v592 = vadd.f32 0.0, %v591
        %593 = vmatmul.bf16.gmra.mxu0 %v428
        %v594 = vpop.f32.mrf.mxu0
        %v595 = vadd.f32 0.0, %v594
        %v596 = vpop.f32.mrf.mxu0
        %v597 = vadd.f32 0.0, %v596
        %598 = vmatmul.bf16.gmra.mxu0 %v431
        %v599 = vpop.f32.mrf.mxu0
        %v600 = vadd.f32 0.0, %v599
        %v601 = vpop.f32.mrf.mxu0
        %v602 = vadd.f32 0.0, %v601
        %603 = vmatmul.bf16.gmra.mxu0 %v434
        %v604 = vpop.f32.mrf.mxu0
        %v605 = vadd.f32 0.0, %v604
        %v606 = vpop.f32.mrf.mxu0
        %v607 = vadd.f32 0.0, %v606
        %608 = vmatmul.bf16.gmra.mxu0 %v437
        %v609 = vpop.f32.mrf.mxu0
        %v610 = vadd.f32 0.0, %v609
        %v611 = vpop.f32.mrf.mxu0
        %v612 = vadd.f32 0.0, %v611
        %613 = vmatmul.bf16.gmra.mxu0 %v440
        %v614 = vpop.f32.mrf.mxu0
        %v615 = vadd.f32 0.0, %v614
        %v616 = vpop.f32.mrf.mxu0
        %v617 = vadd.f32 0.0, %v616
        %618 = vmatmul.bf16.gmra.mxu0 %v443
        %v619 = vpop.f32.mrf.mxu0
        %v620 = vadd.f32 0.0, %v619
        %v621 = vpop.f32.mrf.mxu0
        %v622 = vadd.f32 0.0, %v621
        %623 = vmatmul.bf16.gmra.mxu0 %v446
        %v624 = vpop.f32.mrf.mxu0
        %v625 = vadd.f32 0.0, %v624
        %v626 = vpop.f32.mrf.mxu0
        %v627 = vadd.f32 0.0, %v626
        %628 = vmatmul.bf16.gmra.mxu0 %v449
        %v629 = vpop.f32.mrf.mxu0
        %v630 = vadd.f32 0.0, %v629
        %v631 = vpop.f32.mrf.mxu0
        %v632 = vadd.f32 0.0, %v631
        %633 = vmatmul.bf16.gmra.mxu0 %v452
        %v634 = vpop.f32.mrf.mxu0
        %v635 = vadd.f32 0.0, %v634
        %v636 = vpop.f32.mrf.mxu0
        %v637 = vadd.f32 0.0, %v636
        %638 = vdwg.mxu0
        %v639 = vld [vmem:[#allocation4] sm:$0xff]
        %v640 = vld [vmem:[#allocation4 + $0x8] sm:$0xff]
        %v641 = vld [vmem:[#allocation4 + $0x10] sm:$0xff]
        %v642 = vld [vmem:[#allocation4 + $0x18] sm:$0xff]
        %v643 = vld [vmem:[#allocation4 + $0x20] sm:$0xff]
        %v644 = vld [vmem:[#allocation4 + $0x28] sm:$0xff]
        %v645 = vld [vmem:[#allocation4 + $0x30] sm:$0xff]
        %v646 = vld [vmem:[#allocation4 + $0x38] sm:$0xff]
        %v647 = vld [vmem:[#allocation4 + $0x40] sm:$0xff]
        %v648 = vld [vmem:[#allocation4 + $0x48] sm:$0xff]
        %v649 = vld [vmem:[#allocation4 + $0x50] sm:$0xff]
        %v650 = vld [vmem:[#allocation4 + $0x58] sm:$0xff]
        %v651 = vld [vmem:[#allocation4 + $0x60] sm:$0xff]
        %v652 = vld [vmem:[#allocation4 + $0x68] sm:$0xff]
        %v653 = vld [vmem:[#allocation4 + $0x70] sm:$0xff]
        %v654 = vld [vmem:[#allocation4 + $0x78] sm:$0xff]
        %v655 = vmax.f32 %v471, %v560
        %656 = vmax.xlane.f32.xlu0 %v655
        %v657 = vpop.xlane.xlu0 %656
        %v658 = vmax.f32 %v473, %v562
        %659 = vmax.xlane.f32.xlu0 %v658
        %v660 = vpop.xlane.xlu0 %659
        %v661 = vmax.f32 %v476, %v565
        %662 = vmax.xlane.f32.xlu0 %v661
        %v663 = vpop.xlane.xlu0 %662
        %v664 = vmax.f32 %v478, %v567
        %665 = vmax.xlane.f32.xlu0 %v664
        %v666 = vpop.xlane.xlu0 %665
        %v667 = vmax.f32 %v481, %v570
        %668 = vmax.xlane.f32.xlu0 %v667
        %v669 = vpop.xlane.xlu0 %668
        %v670 = vmax.f32 %v483, %v572
        %671 = vmax.xlane.f32.xlu0 %v670
        %v672 = vpop.xlane.xlu0 %671
        %v673 = vmax.f32 %v486, %v575
        %674 = vmax.xlane.f32.xlu0 %v673
        %v675 = vpop.xlane.xlu0 %674
        %v676 = vmax.f32 %v488, %v577
        %677 = vmax.xlane.f32.xlu0 %v676
        %v678 = vpop.xlane.xlu0 %677
        %v679 = vmax.f32 %v491, %v580
        %680 = vmax.xlane.f32.xlu0 %v679
        %v681 = vpop.xlane.xlu0 %680
        %v682 = vmax.f32 %v493, %v582
        %683 = vmax.xlane.f32.xlu0 %v682
        %v684 = vpop.xlane.xlu0 %683
        %v685 = vmax.f32 %v496, %v585
        %686 = vmax.xlane.f32.xlu0 %v685
        %v687 = vpop.xlane.xlu0 %686
        %v688 = vmax.f32 %v498, %v587
        %689 = vmax.xlane.f32.xlu0 %v688
        %v690 = vpop.xlane.xlu0 %689
        %v691 = vmax.f32 %v501, %v590
        %692 = vmax.xlane.f32.xlu0 %v691
        %v693 = vpop.xlane.xlu0 %692
        %v694 = vmax.f32 %v503, %v592
        %695 = vmax.xlane.f32.xlu0 %v694
        %v696 = vpop.xlane.xlu0 %695
        %v697 = vmax.f32 %v506, %v595
        %698 = vmax.xlane.f32.xlu0 %v697
        %v699 = vpop.xlane.xlu0 %698
        %v700 = vmax.f32 %v508, %v597
        %701 = vmax.xlane.f32.xlu0 %v700
        %v702 = vpop.xlane.xlu0 %701
        %v703 = vmax.f32 %v639, %v657
        %v704 = vmax.f32 %v640, %v660
        %v705 = vmax.f32 %v641, %v663
        %v706 = vmax.f32 %v642, %v666
        %v707 = vmax.f32 %v643, %v669
        %v708 = vmax.f32 %v644, %v672
        %v709 = vmax.f32 %v645, %v675
        %v710 = vmax.f32 %v646, %v678
        %v711 = vmax.f32 %v647, %v681
        %v712 = vmax.f32 %v648, %v684
        %v713 = vmax.f32 %v649, %v687
        %v714 = vmax.f32 %v650, %v690
        %v715 = vmax.f32 %v651, %v693
        %v716 = vmax.f32 %v652, %v696
        %v717 = vmax.f32 %v653, %v699
        %v718 = vmax.f32 %v654, %v702
        %v719 = vsub.f32 %v639, %v703
        %v720 = vsub.f32 %v640, %v704
        %v721 = vsub.f32 %v641, %v705
        %v722 = vsub.f32 %v642, %v706
        %v723 = vsub.f32 %v643, %v707
        %v724 = vsub.f32 %v644, %v708
        %v725 = vsub.f32 %v645, %v709
        %v726 = vsub.f32 %v646, %v710
        %v727 = vsub.f32 %v647, %v711
        %v728 = vsub.f32 %v648, %v712
        %v729 = vsub.f32 %v649, %v713
        %v730 = vsub.f32 %v650, %v714
        %v731 = vsub.f32 %v651, %v715
        %v732 = vsub.f32 %v652, %v716
        %v733 = vsub.f32 %v653, %v717
        %v734 = vsub.f32 %v654, %v718
        %v735 = vmul.f32 %v719, 1.442695
        %v736 = vpow.pop %v735
        %v737 = vmul.f32 %v720, 1.442695
        %v738 = vpow.pop %v737
        %v739 = vmul.f32 %v721, 1.442695
        %v740 = vpow.pop %v739
        %v741 = vmul.f32 %v722, 1.442695
        %v742 = vpow.pop %v741
        %v743 = vmul.f32 %v723, 1.442695
        %v744 = vpow.pop %v743
        %v745 = vmul.f32 %v724, 1.442695
        %v746 = vpow.pop %v745
        %v747 = vmul.f32 %v725, 1.442695
        %v748 = vpow.pop %v747
        %v749 = vmul.f32 %v726, 1.442695
        %v750 = vpow.pop %v749
        %v751 = vmul.f32 %v727, 1.442695
        %v752 = vpow.pop %v751
        %v753 = vmul.f32 %v728, 1.442695
        %v754 = vpow.pop %v753
        %v755 = vmul.f32 %v729, 1.442695
        %v756 = vpow.pop %v755
        %v757 = vmul.f32 %v730, 1.442695
        %v758 = vpow.pop %v757
        %v759 = vmul.f32 %v731, 1.442695
        %v760 = vpow.pop %v759
        %v761 = vmul.f32 %v732, 1.442695
        %v762 = vpow.pop %v761
        %v763 = vmul.f32 %v733, 1.442695
        %v764 = vpow.pop %v763
        %v765 = vmul.f32 %v734, 1.442695
        %v766 = vpow.pop %v765
        %768 = vset.pattern.permute.xlu0 0
        %769 = vperm.xlu0 %768, %v703
        %v770 = vpop.permute.xlu0 %769
        %773 = vset.pattern.permute.xlu0 0
        %774 = vperm.xlu0 %773, %v704
        %v775 = vpop.permute.xlu0 %774
        %778 = vset.pattern.permute.xlu0 0
        %779 = vperm.xlu0 %778, %v705
        %v780 = vpop.permute.xlu0 %779
        %783 = vset.pattern.permute.xlu0 0
        %784 = vperm.xlu0 %783, %v706
        %v785 = vpop.permute.xlu0 %784
        %788 = vset.pattern.permute.xlu0 0
        %789 = vperm.xlu0 %788, %v707
        %v790 = vpop.permute.xlu0 %789
        %793 = vset.pattern.permute.xlu0 0
        %794 = vperm.xlu0 %793, %v708
        %v795 = vpop.permute.xlu0 %794
        %798 = vset.pattern.permute.xlu0 0
        %799 = vperm.xlu0 %798, %v709
        %v800 = vpop.permute.xlu0 %799
        %803 = vset.pattern.permute.xlu0 0
        %804 = vperm.xlu0 %803, %v710
        %v805 = vpop.permute.xlu0 %804
        %808 = vset.pattern.permute.xlu0 0
        %809 = vperm.xlu0 %808, %v711
        %v810 = vpop.permute.xlu0 %809
        %813 = vset.pattern.permute.xlu0 0
        %814 = vperm.xlu0 %813, %v712
        %v815 = vpop.permute.xlu0 %814
        %818 = vset.pattern.permute.xlu0 0
        %819 = vperm.xlu0 %818, %v713
        %v820 = vpop.permute.xlu0 %819
        %823 = vset.pattern.permute.xlu0 0
        %824 = vperm.xlu0 %823, %v714
        %v825 = vpop.permute.xlu0 %824
        %828 = vset.pattern.permute.xlu0 0
        %829 = vperm.xlu0 %828, %v715
        %v830 = vpop.permute.xlu0 %829
        %833 = vset.pattern.permute.xlu0 0
        %834 = vperm.xlu0 %833, %v716
        %v835 = vpop.permute.xlu0 %834
        %838 = vset.pattern.permute.xlu0 0
        %839 = vperm.xlu0 %838, %v717
        %v840 = vpop.permute.xlu0 %839
        %843 = vset.pattern.permute.xlu0 0
        %844 = vperm.xlu0 %843, %v718
        %v845 = vpop.permute.xlu0 %844
        %v847 = vsub.f32 %v471, %v770
        %v848 = vsub.f32 %v560, %v770
        %v849 = vsub.f32 %v473, %v775
        %v850 = vsub.f32 %v562, %v775
        %v851 = vsub.f32 %v476, %v780
        %v852 = vsub.f32 %v565, %v780
        %v853 = vsub.f32 %v478, %v785
        %v854 = vsub.f32 %v567, %v785
        %v855 = vsub.f32 %v481, %v790
        %v856 = vsub.f32 %v570, %v790
        %v857 = vsub.f32 %v483, %v795
        %v858 = vsub.f32 %v572, %v795
        %v859 = vsub.f32 %v486, %v800
        %v860 = vsub.f32 %v575, %v800
        %v861 = vsub.f32 %v488, %v805
        %v862 = vsub.f32 %v577, %v805
        %v863 = vsub.f32 %v491, %v810
        %v864 = vsub.f32 %v580, %v810
        %v865 = vsub.f32 %v493, %v815
        %v866 = vsub.f32 %v582, %v815
        %v867 = vsub.f32 %v496, %v820
        %v868 = vsub.f32 %v585, %v820
        %v869 = vsub.f32 %v498, %v825
        %v870 = vsub.f32 %v587, %v825
        %v871 = vsub.f32 %v501, %v830
        %v872 = vsub.f32 %v590, %v830
        %v873 = vsub.f32 %v503, %v835
        %v874 = vsub.f32 %v592, %v835
        %v875 = vsub.f32 %v506, %v840
        %v876 = vsub.f32 %v595, %v840
        %v877 = vsub.f32 %v508, %v845
        %v878 = vsub.f32 %v597, %v845
        %v879 = vmul.f32 %v847, 1.442695
        %v880 = vpow.pop %v879
        %v881 = vmul.f32 %v848, 1.442695
        %v882 = vpow.pop %v881
        %v883 = vmul.f32 %v849, 1.442695
        %v884 = vpow.pop %v883
        %v885 = vmul.f32 %v850, 1.442695
        %v886 = vpow.pop %v885
        %v887 = vmul.f32 %v851, 1.442695
        %v888 = vpow.pop %v887
        %v889 = vmul.f32 %v852, 1.442695
        %v890 = vpow.pop %v889
        %v891 = vmul.f32 %v853, 1.442695
        %v892 = vpow.pop %v891
        %v893 = vmul.f32 %v854, 1.442695
        %v894 = vpow.pop %v893
        %v895 = vmul.f32 %v855, 1.442695
        %v896 = vpow.pop %v895
        %v897 = vmul.f32 %v856, 1.442695
        %v898 = vpow.pop %v897
        %v899 = vmul.f32 %v857, 1.442695
        %v900 = vpow.pop %v899
        %v901 = vmul.f32 %v858, 1.442695
        %v902 = vpow.pop %v901
        %v903 = vmul.f32 %v859, 1.442695
        %v904 = vpow.pop %v903
        %v905 = vmul.f32 %v860, 1.442695
        %v906 = vpow.pop %v905
        %v907 = vmul.f32 %v861, 1.442695
        %v908 = vpow.pop %v907
        %v909 = vmul.f32 %v862, 1.442695
        %v910 = vpow.pop %v909
        %v911 = vmul.f32 %v863, 1.442695
        %v912 = vpow.pop %v911
        %v913 = vmul.f32 %v864, 1.442695
        %v914 = vpow.pop %v913
        %v915 = vmul.f32 %v865, 1.442695
        %v916 = vpow.pop %v915
        %v917 = vmul.f32 %v866, 1.442695
        %v918 = vpow.pop %v917
        %v919 = vmul.f32 %v867, 1.442695
        %v920 = vpow.pop %v919
        %v921 = vmul.f32 %v868, 1.442695
        %v922 = vpow.pop %v921
        %v923 = vmul.f32 %v869, 1.442695
        %v924 = vpow.pop %v923
        %v925 = vmul.f32 %v870, 1.442695
        %v926 = vpow.pop %v925
        %v927 = vmul.f32 %v871, 1.442695
        %v928 = vpow.pop %v927
        %v929 = vmul.f32 %v872, 1.442695
        %v930 = vpow.pop %v929
        %v931 = vmul.f32 %v873, 1.442695
        %v932 = vpow.pop %v931
        %v933 = vmul.f32 %v874, 1.442695
        %v934 = vpow.pop %v933
        %v935 = vmul.f32 %v875, 1.442695
        %v936 = vpow.pop %v935
        %v937 = vmul.f32 %v876, 1.442695
        %v938 = vpow.pop %v937
        %v939 = vmul.f32 %v877, 1.442695
        %v940 = vpow.pop %v939
        %v941 = vmul.f32 %v878, 1.442695
        %v942 = vpow.pop %v941
        %v943 = vld [vmem:[#allocation2] sm:$0xff]
        %v944 = vld [vmem:[#allocation2 + $0x8] sm:$0xff]
        %v945 = vld [vmem:[#allocation2 + $0x10] sm:$0xff]
        %v946 = vld [vmem:[#allocation2 + $0x18] sm:$0xff]
        %v947 = vld [vmem:[#allocation2 + $0x20] sm:$0xff]
        %v948 = vld [vmem:[#allocation2 + $0x28] sm:$0xff]
        %v949 = vld [vmem:[#allocation2 + $0x30] sm:$0xff]
        %v950 = vld [vmem:[#allocation2 + $0x38] sm:$0xff]
        %v951 = vld [vmem:[#allocation2 + $0x40] sm:$0xff]
        %v952 = vld [vmem:[#allocation2 + $0x48] sm:$0xff]
        %v953 = vld [vmem:[#allocation2 + $0x50] sm:$0xff]
        %v954 = vld [vmem:[#allocation2 + $0x58] sm:$0xff]
        %v955 = vld [vmem:[#allocation2 + $0x60] sm:$0xff]
        %v956 = vld [vmem:[#allocation2 + $0x68] sm:$0xff]
        %v957 = vld [vmem:[#allocation2 + $0x70] sm:$0xff]
        %v958 = vld [vmem:[#allocation2 + $0x78] sm:$0xff]
        %960 = vset.pattern.permute.xlu0 0
        %961 = vperm.xlu0 %960, %v736
        %v962 = vpop.permute.xlu0 %961
        %965 = vset.pattern.permute.xlu0 0
        %966 = vperm.xlu0 %965, %v738
        %v967 = vpop.permute.xlu0 %966
        %970 = vset.pattern.permute.xlu0 0
        %971 = vperm.xlu0 %970, %v740
        %v972 = vpop.permute.xlu0 %971
        %975 = vset.pattern.permute.xlu0 0
        %976 = vperm.xlu0 %975, %v742
        %v977 = vpop.permute.xlu0 %976
        %980 = vset.pattern.permute.xlu0 0
        %981 = vperm.xlu0 %980, %v744
        %v982 = vpop.permute.xlu0 %981
        %985 = vset.pattern.permute.xlu0 0
        %986 = vperm.xlu0 %985, %v746
        %v987 = vpop.permute.xlu0 %986
        %990 = vset.pattern.permute.xlu0 0
        %991 = vperm.xlu0 %990, %v748
        %v992 = vpop.permute.xlu0 %991
        %995 = vset.pattern.permute.xlu0 0
        %996 = vperm.xlu0 %995, %v750
        %v997 = vpop.permute.xlu0 %996
        %1000 = vset.pattern.permute.xlu0 0
        %1001 = vperm.xlu0 %1000, %v752
        %v1002 = vpop.permute.xlu0 %1001
        %1005 = vset.pattern.permute.xlu0 0
        %1006 = vperm.xlu0 %1005, %v754
        %v1007 = vpop.permute.xlu0 %1006
        %1010 = vset.pattern.permute.xlu0 0
        %1011 = vperm.xlu0 %1010, %v756
        %v1012 = vpop.permute.xlu0 %1011
        %1015 = vset.pattern.permute.xlu0 0
        %1016 = vperm.xlu0 %1015, %v758
        %v1017 = vpop.permute.xlu0 %1016
        %1020 = vset.pattern.permute.xlu0 0
        %1021 = vperm.xlu0 %1020, %v760
        %v1022 = vpop.permute.xlu0 %1021
        %1025 = vset.pattern.permute.xlu0 0
        %1026 = vperm.xlu0 %1025, %v762
        %v1027 = vpop.permute.xlu0 %1026
        %1030 = vset.pattern.permute.xlu0 0
        %1031 = vperm.xlu0 %1030, %v764
        %v1032 = vpop.permute.xlu0 %1031
        %1035 = vset.pattern.permute.xlu0 0
        %1036 = vperm.xlu0 %1035, %v766
        %v1037 = vpop.permute.xlu0 %1036
        %v1039 = vmul.f32 %v943, %v962
        %v1040 = vmul.f32 %v944, %v967
        %v1041 = vmul.f32 %v945, %v972
        %v1042 = vmul.f32 %v946, %v977
        %v1043 = vmul.f32 %v947, %v982
        %v1044 = vmul.f32 %v948, %v987
        %v1045 = vmul.f32 %v949, %v992
        %v1046 = vmul.f32 %v950, %v997
        %v1047 = vmul.f32 %v951, %v1002
        %v1048 = vmul.f32 %v952, %v1007
        %v1049 = vmul.f32 %v953, %v1012
        %v1050 = vmul.f32 %v954, %v1017
        %v1051 = vmul.f32 %v955, %v1022
        %v1052 = vmul.f32 %v956, %v1027
        %v1053 = vmul.f32 %v957, %v1032
        %v1054 = vmul.f32 %v958, %v1037
        %v1055 = vpack.c.bf16 %v884, %v880
        %v1056 = vpack.c.bf16 %v886, %v882
        %v1057 = vpack.c.bf16 %v892, %v888
        %v1058 = vpack.c.bf16 %v894, %v890
        %v1059 = vpack.c.bf16 %v900, %v896
        %v1060 = vpack.c.bf16 %v902, %v898
        %v1061 = vpack.c.bf16 %v908, %v904
        %v1062 = vpack.c.bf16 %v910, %v906
        %v1063 = vpack.c.bf16 %v916, %v912
        %v1064 = vpack.c.bf16 %v918, %v914
        %v1065 = vpack.c.bf16 %v924, %v920
        %v1066 = vpack.c.bf16 %v926, %v922
        %v1067 = vpack.c.bf16 %v932, %v928
        %v1068 = vpack.c.bf16 %v934, %v930
        %v1069 = vpack.c.bf16 %v940, %v936
        %v1070 = vpack.c.bf16 %v942, %v938
        %v1071 = vpack.c.bf16 %v513, %v511
        %v1072 = vpack.c.bf16 %v602, %v600
        %v1073 = vpack.c.bf16 %v518, %v516
        %v1074 = vpack.c.bf16 %v607, %v605
        %v1075 = vpack.c.bf16 %v523, %v521
        %v1076 = vpack.c.bf16 %v612, %v610
        %v1077 = vpack.c.bf16 %v528, %v526
        %v1078 = vpack.c.bf16 %v617, %v615
        %v1079 = vpack.c.bf16 %v533, %v531
        %v1080 = vpack.c.bf16 %v622, %v620
        %v1081 = vpack.c.bf16 %v538, %v536
        %v1082 = vpack.c.bf16 %v627, %v625
        %v1083 = vpack.c.bf16 %v543, %v541
        %v1084 = vpack.c.bf16 %v632, %v630
        %v1085 = vpack.c.bf16 %v548, %v546
        %v1086 = vpack.c.bf16 %v637, %v635
        %1087 = vmatpush.bf16.xpose.msra.mxu0 %v1085
        %1088 = vmatpush.bf16.xpose.msra.mxu0 %v1083
        %1089 = vmatpush.bf16.xpose.msra.mxu0 %v1081
        %1090 = vmatpush.bf16.xpose.msra.mxu0 %v1079
        %1091 = vmatpush.bf16.xpose.msra.mxu0 %v1077
        %1092 = vmatpush.bf16.xpose.msra.mxu0 %v1075
        %1093 = vmatpush.bf16.xpose.msra.mxu0 %v1073
        %1094 = vmatpush.bf16.xpose.msra.mxu0 %v1071
        %1095 = vmatmul.bf16.gmra.mxu0 %v1055
        %v1096 = vpop.f32.mrf.mxu0
        %v1097 = vadd.f32 0.0, %v1096
        %v1098 = vpop.f32.mrf.mxu0
        %v1099 = vadd.f32 0.0, %v1098
        %1100 = vmatmul.bf16.gmra.mxu0 %v1057
        %v1101 = vpop.f32.mrf.mxu0
        %v1102 = vadd.f32 0.0, %v1101
        %v1103 = vpop.f32.mrf.mxu0
        %v1104 = vadd.f32 0.0, %v1103
        %1105 = vmatmul.bf16.gmra.mxu0 %v1059
        %v1106 = vpop.f32.mrf.mxu0
        %v1107 = vadd.f32 0.0, %v1106
        %v1108 = vpop.f32.mrf.mxu0
        %v1109 = vadd.f32 0.0, %v1108
        %1110 = vmatmul.bf16.gmra.mxu0 %v1061
        %v1111 = vpop.f32.mrf.mxu0
        %v1112 = vadd.f32 0.0, %v1111
        %v1113 = vpop.f32.mrf.mxu0
        %v1114 = vadd.f32 0.0, %v1113
        %1115 = vmatmul.bf16.gmra.mxu0 %v1063
        %v1116 = vpop.f32.mrf.mxu0
        %v1117 = vadd.f32 0.0, %v1116
        %v1118 = vpop.f32.mrf.mxu0
        %v1119 = vadd.f32 0.0, %v1118
        %1120 = vmatmul.bf16.gmra.mxu0 %v1065
        %v1121 = vpop.f32.mrf.mxu0
        %v1122 = vadd.f32 0.0, %v1121
        %v1123 = vpop.f32.mrf.mxu0
        %v1124 = vadd.f32 0.0, %v1123
        %1125 = vmatmul.bf16.gmra.mxu0 %v1067
        %v1126 = vpop.f32.mrf.mxu0
        %v1127 = vadd.f32 0.0, %v1126
        %v1128 = vpop.f32.mrf.mxu0
        %v1129 = vadd.f32 0.0, %v1128
        %1130 = vmatmul.bf16.gmra.mxu0 %v1069
        %v1131 = vpop.f32.mrf.mxu0
        %v1132 = vadd.f32 0.0, %v1131
        %v1133 = vpop.f32.mrf.mxu0
        %v1134 = vadd.f32 0.0, %v1133
        %1135 = vdwg.mxu0
        %1136 = vmatpush.bf16.xpose.msra.mxu0 %v1086
        %1137 = vmatpush.bf16.xpose.msra.mxu0 %v1084
        %1138 = vmatpush.bf16.xpose.msra.mxu0 %v1082
        %1139 = vmatpush.bf16.xpose.msra.mxu0 %v1080
        %1140 = vmatpush.bf16.xpose.msra.mxu0 %v1078
        %1141 = vmatpush.bf16.xpose.msra.mxu0 %v1076
        %1142 = vmatpush.bf16.xpose.msra.mxu0 %v1074
        %1143 = vmatpush.bf16.xpose.msra.mxu0 %v1072
        %1144 = vmatmul.bf16.gmra.mxu0 %v1056
        %v1145 = vpop.f32.mrf.mxu0
        %v1146 = vadd.f32 %v1097, %v1145
        %v1147 = vpop.f32.mrf.mxu0
        %v1148 = vadd.f32 %v1099, %v1147
        %1149 = vmatmul.bf16.gmra.mxu0 %v1058
        %v1150 = vpop.f32.mrf.mxu0
        %v1151 = vadd.f32 %v1102, %v1150
        %v1152 = vpop.f32.mrf.mxu0
        %v1153 = vadd.f32 %v1104, %v1152
        %1154 = vmatmul.bf16.gmra.mxu0 %v1060
        %v1155 = vpop.f32.mrf.mxu0
        %v1156 = vadd.f32 %v1107, %v1155
        %v1157 = vpop.f32.mrf.mxu0
        %v1158 = vadd.f32 %v1109, %v1157
        %1159 = vmatmul.bf16.gmra.mxu0 %v1062
        %v1160 = vpop.f32.mrf.mxu0
        %v1161 = vadd.f32 %v1112, %v1160
        %v1162 = vpop.f32.mrf.mxu0
        %v1163 = vadd.f32 %v1114, %v1162
        %1164 = vmatmul.bf16.gmra.mxu0 %v1064
        %v1165 = vpop.f32.mrf.mxu0
        %v1166 = vadd.f32 %v1117, %v1165
        %v1167 = vpop.f32.mrf.mxu0
        %v1168 = vadd.f32 %v1119, %v1167
        %1169 = vmatmul.bf16.gmra.mxu0 %v1066
        %v1170 = vpop.f32.mrf.mxu0
        %v1171 = vadd.f32 %v1122, %v1170
        %v1172 = vpop.f32.mrf.mxu0
        %v1173 = vadd.f32 %v1124, %v1172
        %1174 = vmatmul.bf16.gmra.mxu0 %v1068
        %v1175 = vpop.f32.mrf.mxu0
        %v1176 = vadd.f32 %v1127, %v1175
        %v1177 = vpop.f32.mrf.mxu0
        %v1178 = vadd.f32 %v1129, %v1177
        %1179 = vmatmul.bf16.gmra.mxu0 %v1070
        %v1180 = vpop.f32.mrf.mxu0
        %v1181 = vadd.f32 %v1132, %v1180
        %v1182 = vpop.f32.mrf.mxu0
        %v1183 = vadd.f32 %v1134, %v1182
        %1184 = vdwg.mxu0
        %v1185 = vadd.f32 %v1039, %v1146
        %v1186 = vadd.f32 %v1040, %v1148
        %v1187 = vadd.f32 %v1041, %v1151
        %v1188 = vadd.f32 %v1042, %v1153
        %v1189 = vadd.f32 %v1043, %v1156
        %v1190 = vadd.f32 %v1044, %v1158
        %v1191 = vadd.f32 %v1045, %v1161
        %v1192 = vadd.f32 %v1046, %v1163
        %v1193 = vadd.f32 %v1047, %v1166
        %v1194 = vadd.f32 %v1048, %v1168
        %v1195 = vadd.f32 %v1049, %v1171
        %v1196 = vadd.f32 %v1050, %v1173
        %v1197 = vadd.f32 %v1051, %v1176
        %v1198 = vadd.f32 %v1052, %v1178
        %v1199 = vadd.f32 %v1053, %v1181
        %v1200 = vadd.f32 %v1054, %v1183
        %1201 = vst [vmem:[#allocation2] sm:$0xff] %v1185
        %1202 = vst [vmem:[#allocation2 + $0x8] sm:$0xff] %v1186
        %1203 = vst [vmem:[#allocation2 + $0x10] sm:$0xff] %v1187
        %1204 = vst [vmem:[#allocation2 + $0x18] sm:$0xff] %v1188
        %1205 = vst [vmem:[#allocation2 + $0x20] sm:$0xff] %v1189
        %1206 = vst [vmem:[#allocation2 + $0x28] sm:$0xff] %v1190
        %1207 = vst [vmem:[#allocation2 + $0x30] sm:$0xff] %v1191
        %1208 = vst [vmem:[#allocation2 + $0x38] sm:$0xff] %v1192
        %1209 = vst [vmem:[#allocation2 + $0x40] sm:$0xff] %v1193
        %1210 = vst [vmem:[#allocation2 + $0x48] sm:$0xff] %v1194
        %1211 = vst [vmem:[#allocation2 + $0x50] sm:$0xff] %v1195
        %1212 = vst [vmem:[#allocation2 + $0x58] sm:$0xff] %v1196
        %1213 = vst [vmem:[#allocation2 + $0x60] sm:$0xff] %v1197
        %1214 = vst [vmem:[#allocation2 + $0x68] sm:$0xff] %v1198
        %1215 = vst [vmem:[#allocation2 + $0x70] sm:$0xff] %v1199
        %1216 = vst [vmem:[#allocation2 + $0x78] sm:$0xff] %v1200
        %v1217 = vld [vmem:[#allocation3] sm:$0xff]
        %v1218 = vld [vmem:[#allocation3 + $0x8] sm:$0xff]
        %v1219 = vld [vmem:[#allocation3 + $0x10] sm:$0xff]
        %v1220 = vld [vmem:[#allocation3 + $0x18] sm:$0xff]
        %v1221 = vld [vmem:[#allocation3 + $0x20] sm:$0xff]
        %v1222 = vld [vmem:[#allocation3 + $0x28] sm:$0xff]
        %v1223 = vld [vmem:[#allocation3 + $0x30] sm:$0xff]
        %v1224 = vld [vmem:[#allocation3 + $0x38] sm:$0xff]
        %v1225 = vld [vmem:[#allocation3 + $0x40] sm:$0xff]
        %v1226 = vld [vmem:[#allocation3 + $0x48] sm:$0xff]
        %v1227 = vld [vmem:[#allocation3 + $0x50] sm:$0xff]
        %v1228 = vld [vmem:[#allocation3 + $0x58] sm:$0xff]
        %v1229 = vld [vmem:[#allocation3 + $0x60] sm:$0xff]
        %v1230 = vld [vmem:[#allocation3 + $0x68] sm:$0xff]
        %v1231 = vld [vmem:[#allocation3 + $0x70] sm:$0xff]
        %v1232 = vld [vmem:[#allocation3 + $0x78] sm:$0xff]
        %v1233 = vmul.f32 %v1217, %v736
        %v1234 = vmul.f32 %v1218, %v738
        %v1235 = vmul.f32 %v1219, %v740
        %v1236 = vmul.f32 %v1220, %v742
        %v1237 = vmul.f32 %v1221, %v744
        %v1238 = vmul.f32 %v1222, %v746
        %v1239 = vmul.f32 %v1223, %v748
        %v1240 = vmul.f32 %v1224, %v750
        %v1241 = vmul.f32 %v1225, %v752
        %v1242 = vmul.f32 %v1226, %v754
        %v1243 = vmul.f32 %v1227, %v756
        %v1244 = vmul.f32 %v1228, %v758
        %v1245 = vmul.f32 %v1229, %v760
        %v1246 = vmul.f32 %v1230, %v762
        %v1247 = vmul.f32 %v1231, %v764
        %v1248 = vmul.f32 %v1232, %v766
        %v1249 = vadd.f32 %v880, %v882
        %1250 = vadd.xlane.f32.xlu0 %v1249
        %v1251 = vpop.xlane.xlu0 %1250
        %v1252 = vadd.f32 %v884, %v886
        %1253 = vadd.xlane.f32.xlu0 %v1252
        %v1254 = vpop.xlane.xlu0 %1253
        %v1255 = vadd.f32 %v888, %v890
        %1256 = vadd.xlane.f32.xlu0 %v1255
        %v1257 = vpop.xlane.xlu0 %1256
        %v1258 = vadd.f32 %v892, %v894
        %1259 = vadd.xlane.f32.xlu0 %v1258
        %v1260 = vpop.xlane.xlu0 %1259
        %v1261 = vadd.f32 %v896, %v898
        %1262 = vadd.xlane.f32.xlu0 %v1261
        %v1263 = vpop.xlane.xlu0 %1262
        %v1264 = vadd.f32 %v900, %v902
        %1265 = vadd.xlane.f32.xlu0 %v1264
        %v1266 = vpop.xlane.xlu0 %1265
        %v1267 = vadd.f32 %v904, %v906
        %1268 = vadd.xlane.f32.xlu0 %v1267
        %v1269 = vpop.xlane.xlu0 %1268
        %v1270 = vadd.f32 %v908, %v910
        %1271 = vadd.xlane.f32.xlu0 %v1270
        %v1272 = vpop.xlane.xlu0 %1271
        %v1273 = vadd.f32 %v912, %v914
        %1274 = vadd.xlane.f32.xlu0 %v1273
        %v1275 = vpop.xlane.xlu0 %1274
        %v1276 = vadd.f32 %v916, %v918
        %1277 = vadd.xlane.f32.xlu0 %v1276
        %v1278 = vpop.xlane.xlu0 %1277
        %v1279 = vadd.f32 %v920, %v922
        %1280 = vadd.xlane.f32.xlu0 %v1279
        %v1281 = vpop.xlane.xlu0 %1280
        %v1282 = vadd.f32 %v924, %v926
        %1283 = vadd.xlane.f32.xlu0 %v1282
        %v1284 = vpop.xlane.xlu0 %1283
        %v1285 = vadd.f32 %v928, %v930
        %1286 = vadd.xlane.f32.xlu0 %v1285
        %v1287 = vpop.xlane.xlu0 %1286
        %v1288 = vadd.f32 %v932, %v934
        %1289 = vadd.xlane.f32.xlu0 %v1288
        %v1290 = vpop.xlane.xlu0 %1289
        %v1291 = vadd.f32 %v936, %v938
        %1292 = vadd.xlane.f32.xlu0 %v1291
        %v1293 = vpop.xlane.xlu0 %1292
        %v1294 = vadd.f32 %v940, %v942
        %1295 = vadd.xlane.f32.xlu0 %v1294
        %v1296 = vpop.xlane.xlu0 %1295
        %v1297 = vadd.f32 %v1233, %v1251
        %v1298 = vadd.f32 %v1234, %v1254
        %v1299 = vadd.f32 %v1235, %v1257
        %v1300 = vadd.f32 %v1236, %v1260
        %v1301 = vadd.f32 %v1237, %v1263
        %v1302 = vadd.f32 %v1238, %v1266
        %v1303 = vadd.f32 %v1239, %v1269
        %v1304 = vadd.f32 %v1240, %v1272
        %v1305 = vadd.f32 %v1241, %v1275
        %v1306 = vadd.f32 %v1242, %v1278
        %v1307 = vadd.f32 %v1243, %v1281
        %v1308 = vadd.f32 %v1244, %v1284
        %v1309 = vadd.f32 %v1245, %v1287
        %v1310 = vadd.f32 %v1246, %v1290
        %v1311 = vadd.f32 %v1247, %v1293
        %v1312 = vadd.f32 %v1248, %v1296
        %vm1313 = vcmask 7168
        %1314 = vst.msk [vmem:[#allocation3] sm:$0xff] %vm1313, %v1297
        %1315 = vst.msk [vmem:[#allocation3 + $0x8] sm:$0xff] %vm1313, %v1298
        %1316 = vst.msk [vmem:[#allocation3 + $0x10] sm:$0xff] %vm1313, %v1299
        %1317 = vst.msk [vmem:[#allocation3 + $0x18] sm:$0xff] %vm1313, %v1300
        %1318 = vst.msk [vmem:[#allocation3 + $0x20] sm:$0xff] %vm1313, %v1301
        %1319 = vst.msk [vmem:[#allocation3 + $0x28] sm:$0xff] %vm1313, %v1302
        %1320 = vst.msk [vmem:[#allocation3 + $0x30] sm:$0xff] %vm1313, %v1303
        %1321 = vst.msk [vmem:[#allocation3 + $0x38] sm:$0xff] %vm1313, %v1304
        %1322 = vst.msk [vmem:[#allocation3 + $0x40] sm:$0xff] %vm1313, %v1305
        %1323 = vst.msk [vmem:[#allocation3 + $0x48] sm:$0xff] %vm1313, %v1306
        %1324 = vst.msk [vmem:[#allocation3 + $0x50] sm:$0xff] %vm1313, %v1307
        %1325 = vst.msk [vmem:[#allocation3 + $0x58] sm:$0xff] %vm1313, %v1308
        %1326 = vst.msk [vmem:[#allocation3 + $0x60] sm:$0xff] %vm1313, %v1309
        %1327 = vst.msk [vmem:[#allocation3 + $0x68] sm:$0xff] %vm1313, %v1310
        %1328 = vst.msk [vmem:[#allocation3 + $0x70] sm:$0xff] %vm1313, %v1311
        %1329 = vst.msk [vmem:[#allocation3 + $0x78] sm:$0xff] %vm1313, %v1312
        %1330 = vst.msk [vmem:[#allocation4] sm:$0xff] %vm1313, %v703
        %1331 = vst.msk [vmem:[#allocation4 + $0x8] sm:$0xff] %vm1313, %v704
        %1332 = vst.msk [vmem:[#allocation4 + $0x10] sm:$0xff] %vm1313, %v705
        %1333 = vst.msk [vmem:[#allocation4 + $0x18] sm:$0xff] %vm1313, %v706
        %1334 = vst.msk [vmem:[#allocation4 + $0x20] sm:$0xff] %vm1313, %v707
        %1335 = vst.msk [vmem:[#allocation4 + $0x28] sm:$0xff] %vm1313, %v708
        %1336 = vst.msk [vmem:[#allocation4 + $0x30] sm:$0xff] %vm1313, %v709
        %1337 = vst.msk [vmem:[#allocation4 + $0x38] sm:$0xff] %vm1313, %v710
        %1338 = vst.msk [vmem:[#allocation4 + $0x40] sm:$0xff] %vm1313, %v711
        %1339 = vst.msk [vmem:[#allocation4 + $0x48] sm:$0xff] %vm1313, %v712
        %1340 = vst.msk [vmem:[#allocation4 + $0x50] sm:$0xff] %vm1313, %v713
        %1341 = vst.msk [vmem:[#allocation4 + $0x58] sm:$0xff] %vm1313, %v714
        %1342 = vst.msk [vmem:[#allocation4 + $0x60] sm:$0xff] %vm1313, %v715
        %1343 = vst.msk [vmem:[#allocation4 + $0x68] sm:$0xff] %vm1313, %v716
        %1344 = vst.msk [vmem:[#allocation4 + $0x70] sm:$0xff] %vm1313, %v717
        %1345 = vst.msk [vmem:[#allocation4 + $0x78] sm:$0xff] %vm1313, %v718
        // Predicated region
        $region45: #{tpu_custom_call.1} parent=35 // pred_check
          %p1346 = pneg %p234
        $region46: #{tpu_custom_call.1} parent=35 // pred_check_branch
          %1348 = sbr.rel (%p1346) target = $region48
        $region47: #{tpu_custom_call.1} parent=35 // pred_region
          %v1349 = vld [vmem:[#allocation3] sm:$0xff]
          %v1350 = vld [vmem:[#allocation3 + $0x8] sm:$0xff]
          %v1351 = vld [vmem:[#allocation3 + $0x10] sm:$0xff]
          %v1352 = vld [vmem:[#allocation3 + $0x18] sm:$0xff]
          %v1353 = vld [vmem:[#allocation3 + $0x20] sm:$0xff]
          %v1354 = vld [vmem:[#allocation3 + $0x28] sm:$0xff]
          %v1355 = vld [vmem:[#allocation3 + $0x30] sm:$0xff]
          %v1356 = vld [vmem:[#allocation3 + $0x38] sm:$0xff]
          %v1357 = vld [vmem:[#allocation3 + $0x40] sm:$0xff]
          %v1358 = vld [vmem:[#allocation3 + $0x48] sm:$0xff]
          %v1359 = vld [vmem:[#allocation3 + $0x50] sm:$0xff]
          %v1360 = vld [vmem:[#allocation3 + $0x58] sm:$0xff]
          %v1361 = vld [vmem:[#allocation3 + $0x60] sm:$0xff]
          %v1362 = vld [vmem:[#allocation3 + $0x68] sm:$0xff]
          %v1363 = vld [vmem:[#allocation3 + $0x70] sm:$0xff]
          %v1364 = vld [vmem:[#allocation3 + $0x78] sm:$0xff]
          %v1365 = vrcp.pop %v1349
          %v1366 = vrcp.pop %v1350
          %v1367 = vrcp.pop %v1351
          %v1368 = vrcp.pop %v1352
          %v1369 = vrcp.pop %v1353
          %v1370 = vrcp.pop %v1354
          %v1371 = vrcp.pop %v1355
          %v1372 = vrcp.pop %v1356
          %v1373 = vrcp.pop %v1357
          %v1374 = vrcp.pop %v1358
          %v1375 = vrcp.pop %v1359
          %v1376 = vrcp.pop %v1360
          %v1377 = vrcp.pop %v1361
          %v1378 = vrcp.pop %v1362
          %v1379 = vrcp.pop %v1363
          %v1380 = vrcp.pop %v1364
          %v1381 = vld [vmem:[#allocation2] sm:$0xff]
          %v1382 = vld [vmem:[#allocation2 + $0x8] sm:$0xff]
          %v1383 = vld [vmem:[#allocation2 + $0x10] sm:$0xff]
          %v1384 = vld [vmem:[#allocation2 + $0x18] sm:$0xff]
          %v1385 = vld [vmem:[#allocation2 + $0x20] sm:$0xff]
          %v1386 = vld [vmem:[#allocation2 + $0x28] sm:$0xff]
          %v1387 = vld [vmem:[#allocation2 + $0x30] sm:$0xff]
          %v1388 = vld [vmem:[#allocation2 + $0x38] sm:$0xff]
          %v1389 = vld [vmem:[#allocation2 + $0x40] sm:$0xff]
          %v1390 = vld [vmem:[#allocation2 + $0x48] sm:$0xff]
          %v1391 = vld [vmem:[#allocation2 + $0x50] sm:$0xff]
          %v1392 = vld [vmem:[#allocation2 + $0x58] sm:$0xff]
          %v1393 = vld [vmem:[#allocation2 + $0x60] sm:$0xff]
          %v1394 = vld [vmem:[#allocation2 + $0x68] sm:$0xff]
          %v1395 = vld [vmem:[#allocation2 + $0x70] sm:$0xff]
          %v1396 = vld [vmem:[#allocation2 + $0x78] sm:$0xff]
          %1398 = vset.pattern.permute.xlu0 0
          %1399 = vperm.xlu0 %1398, %v1365
          %v1400 = vpop.permute.xlu0 %1399
          %1403 = vset.pattern.permute.xlu0 0
          %1404 = vperm.xlu0 %1403, %v1366
          %v1405 = vpop.permute.xlu0 %1404
          %1408 = vset.pattern.permute.xlu0 0
          %1409 = vperm.xlu0 %1408, %v1367
          %v1410 = vpop.permute.xlu0 %1409
          %1413 = vset.pattern.permute.xlu0 0
          %1414 = vperm.xlu0 %1413, %v1368
          %v1415 = vpop.permute.xlu0 %1414
          %1418 = vset.pattern.permute.xlu0 0
          %1419 = vperm.xlu0 %1418, %v1369
          %v1420 = vpop.permute.xlu0 %1419
          %1423 = vset.pattern.permute.xlu0 0
          %1424 = vperm.xlu0 %1423, %v1370
          %v1425 = vpop.permute.xlu0 %1424
          %1428 = vset.pattern.permute.xlu0 0
          %1429 = vperm.xlu0 %1428, %v1371
          %v1430 = vpop.permute.xlu0 %1429
          %1433 = vset.pattern.permute.xlu0 0
          %1434 = vperm.xlu0 %1433, %v1372
          %v1435 = vpop.permute.xlu0 %1434
          %1438 = vset.pattern.permute.xlu0 0
          %1439 = vperm.xlu0 %1438, %v1373
          %v1440 = vpop.permute.xlu0 %1439
          %1443 = vset.pattern.permute.xlu0 0
          %1444 = vperm.xlu0 %1443, %v1374
          %v1445 = vpop.permute.xlu0 %1444
          %1448 = vset.pattern.permute.xlu0 0
          %1449 = vperm.xlu0 %1448, %v1375
          %v1450 = vpop.permute.xlu0 %1449
          %1453 = vset.pattern.permute.xlu0 0
          %1454 = vperm.xlu0 %1453, %v1376
          %v1455 = vpop.permute.xlu0 %1454
          %1458 = vset.pattern.permute.xlu0 0
          %1459 = vperm.xlu0 %1458, %v1377
          %v1460 = vpop.permute.xlu0 %1459
          %1463 = vset.pattern.permute.xlu0 0
          %1464 = vperm.xlu0 %1463, %v1378
          %v1465 = vpop.permute.xlu0 %1464
          %1468 = vset.pattern.permute.xlu0 0
          %1469 = vperm.xlu0 %1468, %v1379
          %v1470 = vpop.permute.xlu0 %1469
          %1473 = vset.pattern.permute.xlu0 0
          %1474 = vperm.xlu0 %1473, %v1380
          %v1475 = vpop.permute.xlu0 %1474
          %v1477 = vmul.f32 %v1381, %v1400
          %v1478 = vmul.f32 %v1382, %v1405
          %v1479 = vmul.f32 %v1383, %v1410
          %v1480 = vmul.f32 %v1384, %v1415
          %v1481 = vmul.f32 %v1385, %v1420
          %v1482 = vmul.f32 %v1386, %v1425
          %v1483 = vmul.f32 %v1387, %v1430
          %v1484 = vmul.f32 %v1388, %v1435
          %v1485 = vmul.f32 %v1389, %v1440
          %v1486 = vmul.f32 %v1390, %v1445
          %v1487 = vmul.f32 %v1391, %v1450
          %v1488 = vmul.f32 %v1392, %v1455
          %v1489 = vmul.f32 %v1393, %v1460
          %v1490 = vmul.f32 %v1394, %v1465
          %v1491 = vmul.f32 %v1395, %v1470
          %v1492 = vmul.f32 %v1396, %v1475
          %v1493 = vld [vmem:[%s3] sm:$0xff]
          %v1494 = vld [vmem:[%s3 + $0x8] sm:$0xff]
          %v1495 = vld [vmem:[%s3 + $0x10] sm:$0xff]
          %v1496 = vld [vmem:[%s3 + $0x18] sm:$0xff]
          %v1497 = vld [vmem:[%s3 + $0x20] sm:$0xff]
          %v1498 = vld [vmem:[%s3 + $0x28] sm:$0xff]
          %v1499 = vld [vmem:[%s3 + $0x30] sm:$0xff]
          %v1500 = vld [vmem:[%s3 + $0x38] sm:$0xff]
          %v1501 = vld [vmem:[%s3 + $0x40] sm:$0xff]
          %v1502 = vld [vmem:[%s3 + $0x48] sm:$0xff]
          %v1503 = vld [vmem:[%s3 + $0x50] sm:$0xff]
          %v1504 = vld [vmem:[%s3 + $0x58] sm:$0xff]
          %v1505 = vld [vmem:[%s3 + $0x60] sm:$0xff]
          %v1506 = vld [vmem:[%s3 + $0x68] sm:$0xff]
          %v1507 = vld [vmem:[%s3 + $0x70] sm:$0xff]
          %v1508 = vld [vmem:[%s3 + $0x78] sm:$0xff]
          %v1509 = vmul.f32 %v1477, %v1493
          %v1510 = vmul.f32 %v1478, %v1494
          %v1511 = vmul.f32 %v1479, %v1495
          %v1512 = vmul.f32 %v1480, %v1496
          %v1513 = vmul.f32 %v1481, %v1497
          %v1514 = vmul.f32 %v1482, %v1498
          %v1515 = vmul.f32 %v1483, %v1499
          %v1516 = vmul.f32 %v1484, %v1500
          %v1517 = vmul.f32 %v1485, %v1501
          %v1518 = vmul.f32 %v1486, %v1502
          %v1519 = vmul.f32 %v1487, %v1503
          %v1520 = vmul.f32 %v1488, %v1504
          %v1521 = vmul.f32 %v1489, %v1505
          %v1522 = vmul.f32 %v1490, %v1506
          %v1523 = vmul.f32 %v1491, %v1507
          %v1524 = vmul.f32 %v1492, %v1508
          %v1525 = vld [vmem:[%s2] sm:$0xf]
          %v1526 = vpack.c.bf16 %v1510, %v1509
          %v1527 = vpack.c.bf16 %v1512, %v1511
          %v1528 = vpack.c.bf16 %v1514, %v1513
          %v1529 = vpack.c.bf16 %v1516, %v1515
          %v1530 = vpack.c.bf16 %v1518, %v1517
          %v1531 = vpack.c.bf16 %v1520, %v1519
          %v1532 = vpack.c.bf16 %v1522, %v1521
          %v1533 = vpack.c.bf16 %v1524, %v1523
          %1534 = vmatpush.bf16.xpose.msra.mxu0 %v1533
          %1535 = vmatpush.bf16.xpose.msra.mxu0 %v1532
          %1536 = vmatpush.bf16.xpose.msra.mxu0 %v1531
          %1537 = vmatpush.bf16.xpose.msra.mxu0 %v1530
          %1538 = vmatpush.bf16.xpose.msra.mxu0 %v1529
          %1539 = vmatpush.bf16.xpose.msra.mxu0 %v1528
          %1540 = vmatpush.bf16.xpose.msra.mxu0 %v1527
          %1541 = vmatpush.bf16.xpose.msra.mxu0 %v1526
          %1542 = vmatmul.bf16.gmra.mxu0 %v1525
          %v1543 = vpop.f32.mrf.mxu0
          %v1544 = vadd.f32 0.0, %v1543
          %v1545 = vpop.f32.mrf.mxu0
          %1546 = vdwg.mxu0
          %v1547 = vpack.c.bf16 %v1544, %v1544
          %1548 = vst [vmem:[%s231] sm:$0xf] %v1547
        $region48: #{tpu_custom_call.1} parent=35 // pred_fallthru
          _
        %s1549 = sand.u32 %s132, 1
        %s1550 = scalar_lea.sflag [#allocation7], %s1549
        %s1551 = sand.u32 %s132, 1
        %s1552 = smul.addr %s1551, 4
        %s1553 = scalar_lea.vmem [#allocation8], %s1552
        // Predicated region
        $region49: #{tpu_custom_call.1} parent=35 // pred_check
          %p1554 = pneg %p142
        $region50: #{tpu_custom_call.1} parent=35 // pred_check_branch
          %1556 = sbr.rel (%p1554) target = $region52
        $region51: #{tpu_custom_call.1} parent=35 // pred_region
          %1558 = vsyncadd %s1550, 0
          %s1559 = smul.addr %s25, 4
          %s1560 = scalar_lea.hbm %s4, %s1559
          %s1562 = sshll.u32 %s1553, 4
          %s1563 = int_to_ptr.vmem [resolvable:$true] %s1562
          %s1564 = sshll.u32 %s1560, 4
          %s1565 = int_to_ptr.hbm [resolvable:$true] %s1564
          %1567 = dma.vmem_to_hbm [thread:$0]  %s1563, 64, %s1565, %s1550
        $region52: #{tpu_custom_call.1} parent=35 // pred_fallthru
          _
      $region36: #{tpu_custom_call.1} parent=5 // pred_fallthru
        _
      %p1568 = scmp.le.s32.totalorder 2, %s16
      // Predicated region
      $region53: #{tpu_custom_call.1} parent=5 // pred_check
        %p1569 = pneg %p1568
      $region54: #{tpu_custom_call.1} parent=5 // pred_check_branch
        %1571 = sbr.rel (%p1569) target = $region56
      $region55: #{tpu_custom_call.1} parent=5 // pred_region
        %s1572 = ssub.s32 %s16, 2
        // Predicated region
        $region57: #{tpu_custom_call.1} parent=55 // pred_check
          %p1573 = pneg %p148
        $region58: #{tpu_custom_call.1} parent=55 // pred_check_branch
          %1575 = sbr.rel (%p1573) target = $region60
        $region59: #{tpu_custom_call.1} parent=55 // pred_region
          %s1576 = sand.u32 %s133, 1
          %s1577 = scalar_lea.sflag [#allocation7], %s1576
          %s1578 = sand.u32 %s133, 1
          %s1579 = smul.addr %s1578, 4
          %s1580 = scalar_lea.vmem [#allocation8], %s1579
          %1582 = dma.done %s1577, 64
        $region60: #{tpu_custom_call.1} parent=55 // pred_fallthru
          _
      $region56: #{tpu_custom_call.1} parent=5 // pred_fallthru
        _
    $region6: #{tpu_custom_call.1} parent=1 // loop_footer
      %s20 = sadd.s32 1, %s16
    $region7: #{tpu_custom_call.1} parent=1 // loop_footer_branch
      %15 = sbr.rel target = $region3
    $region8: #{tpu_custom_call.1} parent=1 // loop_exit
      _
    %1583 = vsyncpa [#allocation6], 1
    %s1584 = scalar_lea.sflag [#allocation6], 1
    %1585 = vsyncpa %s1584, 1
    %1586 = vsyncpa [#allocation7], 1
    %s1587 = scalar_lea.sflag [#allocation7], 1
    %1588 = vsyncpa %s1587, 1

</llo_original>
